<compile_context>
chip_gen: v5e
topology: v5e:2x2
jax: 0.10.0
libtpu: 0.0.40
codegen_flags: <defaults>
</compile_context>

<pallas_src>
import functools

import jax
import jax.numpy as jnp
from jax import lax
from jax.experimental import pallas as pl
from jax.experimental.pallas import tpu as pltpu


# ----------------------------- activations ----------------------------------
def _relu6(x):
    return jnp.minimum(jnp.maximum(x, 0.0), 6.0)


def _hardswish(x):
    # x * relu6(x + 3) / 6, written with a multiply so it stays a VPU mul.
    return x * _relu6(x + 3.0) * (1.0 / 6.0)


def _act(x, activate):
    return _relu6(x) if activate == "relu" else _hardswish(x)


# ------------------------------- kernel --------------------------------------
def _se_ib_kernel(*refs, K, stride, pad, activate, use_se, Ho, Wo):
    it = iter(refs)
    x_ref = next(it)                    # (Bblk, H, W, Cin)   bf16
    w1_ref, b1_ref = next(it), next(it)  # (Cin, Cmid) bf16, (1, Cmid) f32
    wd_ref, bd_ref = next(it), next(it)  # (K*K, Cmid) bf16, (1, Cmid) f32
    if use_se:
        wse1_ref, bse1_ref = next(it), next(it)
        wse2_ref, bse2_ref = next(it), next(it)
    wp_ref, bp_ref = next(it), next(it)  # (Cmid, Cout) bf16, (1, Cout) f32
    if stride == 1:
        ws_ref, bs_ref = next(it), next(it)
    o_ref = next(it)                     # (Bblk, Ho, Wo, Cout) f32

    x = x_ref[...]
    Bblk, H, W, Cin = x.shape
    Cmid = w1_ref.shape[1]
    Cout = wp_ref.shape[1]
    M = Bblk * H * W
    Mo = Bblk * Ho * Wo

    x2d = x.reshape(M, Cin)

    # ---- 1) 1x1 expand conv (BN folded) + activation; bf16 MXU, f32 accum ---
    y1 = jnp.dot(x2d, w1_ref[...], preferred_element_type=jnp.float32)
    y1 = _act(y1 + b1_ref[...], activate)               # f32 (M, Cmid)
    y1 = y1.reshape(Bblk, H, W, Cmid)

    # ---- 2) depthwise KxK conv (groups=Cmid, BN folded) + activation --------
    # W-axis shifts: sublane roll + iota mask (no padded scratch buffer).
    # H-axis shifts: free slices / concat on a leading (untiled) dim.
    wd = wd_ref[...].astype(jnp.float32)                 # (K*K, Cmid)
    w_ids = lax.broadcasted_iota(jnp.int32, (Bblk, H, W, Cmid), 2)

    y1_w = []
    for kw in range(K):
        dw = kw - pad
        if dw == 0:
            y1_w.append(y1)
        else:
            rolled = pltpu.roll(y1, shift=(-dw) % W, axis=2)
            valid = (w_ids + dw >= 0) & (w_ids + dw < W)
            y1_w.append(jnp.where(valid, rolled, 0.0))

    acc = jnp.zeros((Bblk, H, W, Cmid), jnp.float32)
    for kh in range(K):
        dh = kh - pad
        for kw in range(K):
            t = y1_w[kw]
            if dh > 0:
                t = jnp.concatenate(
                    [t[:, dh:, :, :],
                     jnp.zeros((Bblk, dh, W, Cmid), jnp.float32)], axis=1)
            elif dh < 0:
                t = jnp.concatenate(
                    [jnp.zeros((Bblk, -dh, W, Cmid), jnp.float32),
                     t[:, :H + dh, :, :]], axis=1)
            idx = kh * K + kw
            acc = acc + t * wd[idx:idx + 1, :]
    if stride != 1:
        # Stride>1 only subsamples the stride-1 result (single strided slice).
        acc = acc[:, ::stride, ::stride, :]
    y2 = _act(acc + bd_ref[...].reshape(1, 1, 1, Cmid), activate)  # (B,Ho,Wo,Cmid)

    # ---- 3) Squeeze-and-Excite ----------------------------------------------
    if use_se:
        # AvgPool2d(kernel=se_kernel_size=Ho) over the full map == spatial mean.
        pooled = jnp.sum(jnp.sum(y2, axis=1), axis=1) * (1.0 / (Ho * Wo))
        z = _relu6(jnp.dot(pooled.astype(jnp.bfloat16), wse1_ref[...],
                           preferred_element_type=jnp.float32) + bse1_ref[...])
        s = _hardswish(jnp.dot(z.astype(jnp.bfloat16), wse2_ref[...],
                               preferred_element_type=jnp.float32) + bse2_ref[...])
        y2 = y2 * s[:, None, None, :]

    # ---- 4) 1x1 point conv (BN folded) + activation --------------------------
    y3 = jnp.dot(y2.reshape(Mo, Cmid).astype(jnp.bfloat16), wp_ref[...],
                 preferred_element_type=jnp.float32)
    y3 = _act(y3 + bp_ref[...], activate)

    # ---- 5) shortcut 1x1 conv + BN (no activation) when stride == 1 ----------
    if stride == 1:
        y3 = y3 + jnp.dot(x2d, ws_ref[...],
                          preferred_element_type=jnp.float32) + bs_ref[...]

    o_ref[...] = y3.reshape(Bblk, Ho, Wo, Cout).astype(o_ref.dtype)


# ------------------------------- wrapper --------------------------------------
def _pick_batch_block(N, H, W):
    """Images per grid step: enough to give the matmuls >=128 M-rows."""
    want = max(1, -(-128 // (H * W)))
    b = min(N, want)
    while N % b:
        b -= 1
    return b


def se_inverted_bottleneck(x_nchw, params, *, kernel_size, stride, activate,
                           use_se, se_kernel_size):
    N, Cin, H, W = x_nchw.shape
    pad = (kernel_size - 1) // 2
    Ho = (H + 2 * pad - kernel_size) // stride + 1
    Wo = (W + 2 * pad - kernel_size) // stride + 1
    if use_se:
        # The PyTorch SE block only type-checks when the pooled map is 1x1.
        assert se_kernel_size == Ho == Wo
    Cmid = params["w1"].shape[1]
    Cout = params["wp"].shape[1]
    K = kernel_size

    # NCHW -> NHWC; MXU operands in bf16, biases in f32.
    x = jnp.transpose(x_nchw, (0, 2, 3, 1)).astype(jnp.bfloat16)
    wq = lambda k: params[k].astype(jnp.bfloat16)
    bq = lambda k: params[k].astype(jnp.float32)

    plist = [wq("w1"), bq("b1"), wq("wd").reshape(K * K, Cmid), bq("bd")]
    if use_se:
        plist += [wq("wse1"), bq("bse1"), wq("wse2"), bq("bse2")]
    plist += [wq("wp"), bq("bp")]
    if stride == 1:
        plist += [wq("ws"), bq("bs")]

    Bblk = _pick_batch_block(N, H, W)
    grid = (N // Bblk,)

    kernel = functools.partial(
        _se_ib_kernel, K=K, stride=stride, pad=pad, activate=activate,
        use_se=use_se, Ho=Ho, Wo=Wo)

    in_specs = [pl.BlockSpec((Bblk, H, W, Cin), lambda b: (b, 0, 0, 0))]
    for p in plist:
        in_specs.append(pl.BlockSpec(p.shape, lambda b, _nd=p.ndim: (0,) * _nd))

    flops = (2 * N * H * W * Cin * Cmid
             + 2 * N * Ho * Wo * K * K * Cmid
             + 2 * N * Ho * Wo * Cmid * Cout)
    if stride == 1:
        flops += 2 * N * H * W * Cin * Cout
    if use_se:
        flops += 4 * N * Cmid * (Cmid // 4)
    bytes_accessed = (int(x.size) * 2
                      + (N // Bblk) * sum(int(p.size) * p.dtype.itemsize
                                          for p in plist)
                      + N * Ho * Wo * Cout * 4)

    out = pl.pallas_call(
        kernel,
        out_shape=jax.ShapeDtypeStruct((N, Ho, Wo, Cout), jnp.float32),
        grid_spec=pltpu.PrefetchScalarGridSpec(
            num_scalar_prefetch=0,
            grid=grid,
            in_specs=in_specs,
            out_specs=pl.BlockSpec((Bblk, Ho, Wo, Cout),
                                   lambda b: (b, 0, 0, 0)),
        ),
        compiler_params=pltpu.CompilerParams(
            dimension_semantics=("parallel",),
            vmem_limit_bytes=32 * 1024 * 1024),
        cost_estimate=pl.CostEstimate(
            flops=int(flops), transcendentals=0,
            bytes_accessed=int(bytes_accessed)),
    )(x, *plist)

    return jnp.transpose(out, (0, 3, 1, 2))        # NHWC -> NCHW (f32)


# ----------------------- synthetic parameter setup ----------------------------
def _fold_bn(w, b, gamma, beta, mean, var, eps=1e-5):
    """Fold eval-mode BatchNorm into conv weight (..., Cout) and bias (Cout,)."""
    scale = gamma / jnp.sqrt(var + eps)
    return w * scale, (b - mean) * scale + beta


def make_params(key, Cin, Cmid, Cout, K):
    counter = iter(range(10_000))

    def nk():
        return jax.random.fold_in(key, next(counter))

    def w(shape, scale=0.2):
        return jax.random.normal(nk(), shape, jnp.float32) * scale

    def bn(C):
        gamma = 1.0 + 0.1 * jax.random.normal(nk(), (C,), jnp.float32)
        beta = 0.1 * jax.random.normal(nk(), (C,), jnp.float32)
        mean = 0.1 * jax.random.normal(nk(), (C,), jnp.float32)
        var = 1.0 + 0.1 * jnp.abs(jax.random.normal(nk(), (C,), jnp.float32))
        return gamma, beta, mean, var

    Cse = Cmid // 4

    w1, b1 = _fold_bn(w((Cin, Cmid)), w((Cmid,), 0.05), *bn(Cmid))
    wdep, bdep = _fold_bn(w((K, K, Cmid), 0.3), w((Cmid,), 0.05), *bn(Cmid))
    wp, bp = _fold_bn(w((Cmid, Cout)), w((Cout,), 0.05), *bn(Cout))
    ws, bs = _fold_bn(w((Cin, Cout)), w((Cout,), 0.05), *bn(Cout))
    wse1, bse1 = w((Cmid, Cse)), w((Cse,), 0.05)
    wse2, bse2 = w((Cse, Cmid)), w((Cmid,), 0.05)

    return dict(
        w1=w1, b1=b1[None, :],
        wd=wdep, bd=bdep[None, :],
        wse1=wse1, bse1=bse1[None, :],
        wse2=wse2, bse2=bse2[None, :],
        wp=wp, bp=bp[None, :],
        ws=ws, bs=bs[None, :],
    )


# --------------------------- pure-JAX reference --------------------------------
def ref_forward(x_nchw, params, *, kernel_size, stride, activate, use_se):
    """Reference mirroring the kernel's bf16 rounding of matmul inputs."""
    hi = lax.Precision.HIGHEST
    q = lambda a: a.astype(jnp.bfloat16).astype(jnp.float32)
    act = _relu6 if activate == "relu" else _hardswish
    K = kernel_size
    pad = (K - 1) // 2
    Cmid = params["w1"].shape[1]

    x = q(jnp.transpose(x_nchw, (0, 2, 3, 1)).astype(jnp.float32))
    w1, b1 = q(params["w1"]), params["b1"].astype(jnp.float32)[0]
    wd, bd = q(params["wd"]), params["bd"].astype(jnp.float32)[0]
    wp, bp = q(params["wp"]), params["bp"].astype(jnp.float32)[0]

    y1 = act(jnp.einsum("nhwc,cm->nhwm", x, w1, precision=hi) + b1)
    y2 = lax.conv_general_dilated(
        y1, wd.reshape(K, K, 1, Cmid), window_strides=(stride, stride),
        padding=[(pad, pad), (pad, pad)],
        dimension_numbers=("NHWC", "HWIO", "NHWC"),
        feature_group_count=Cmid, precision=hi)
    y2 = act(y2 + bd)
    if use_se:
        wse1, bse1 = q(params["wse1"]), params["bse1"].astype(jnp.float32)[0]
        wse2, bse2 = q(params["wse2"]), params["bse2"].astype(jnp.float32)[0]
        pooled = jnp.mean(y2, axis=(1, 2))
        z = _relu6(jnp.dot(q(pooled), wse1, precision=hi) + bse1)
        s = _hardswish(jnp.dot(q(z), wse2, precision=hi) + bse2)
        y2 = y2 * s[:, None, None, :]
    y3 = act(jnp.einsum("nhwc,co->nhwo", q(y2), wp, precision=hi) + bp)
    if stride == 1:
        ws, bs = q(params["ws"]), params["bs"].astype(jnp.float32)[0]
        y3 = y3 + jnp.einsum("nhwc,co->nhwo", x, ws, precision=hi) + bs
    return jnp.transpose(y3, (0, 3, 1, 2))


# --------------------------------- main ----------------------------------------
if __name__ == "__main__":
    key = jax.random.PRNGKey(0)
    kx, kp = jax.random.split(key)

    N, Cin, H, W = 2, 8, 8, 8
    Cmid, Cout = 16, 8
    K, stride = 3, 1
    activate, use_se = "hswish", True
    se_kernel_size = H   # spatial size after the (stride=1) depthwise conv

    x = jax.random.normal(kx, (N, Cin, H, W), jnp.float32)
    params = make_params(kp, Cin, Cmid, Cout, K)

    out = se_inverted_bottleneck(
        x, params, kernel_size=K, stride=stride, activate=activate,
        use_se=use_se, se_kernel_size=se_kernel_size)
    out = jax.block_until_ready(out)

    ref = ref_forward(x, params, kernel_size=K, stride=stride,
                      activate=activate, use_se=use_se)

    assert out.shape == (N, Cout, H, W), out.shape
    max_err = float(jnp.max(jnp.abs(out - ref)))
    assert jnp.allclose(out, ref, rtol=5e-2, atol=5e-2), max_err
    print("KERNEL_OK")
</pallas_src>

<mosaic_0001>
module attributes {stable_mosaic.version = 11 : i64} {
  func.func @_se_ib_kernel(%arg0: i32, %arg1: memref<2x8x8x8xbf16, #tpu.memory_space<vmem>>, %arg2: memref<8x16xbf16, #tpu.memory_space<vmem>>, %arg3: memref<1x16xf32, #tpu.memory_space<vmem>>, %arg4: memref<9x16xbf16, #tpu.memory_space<vmem>>, %arg5: memref<1x16xf32, #tpu.memory_space<vmem>>, %arg6: memref<16x4xbf16, #tpu.memory_space<vmem>>, %arg7: memref<1x4xf32, #tpu.memory_space<vmem>>, %arg8: memref<4x16xbf16, #tpu.memory_space<vmem>>, %arg9: memref<1x16xf32, #tpu.memory_space<vmem>>, %arg10: memref<16x8xbf16, #tpu.memory_space<vmem>>, %arg11: memref<1x8xf32, #tpu.memory_space<vmem>>, %arg12: memref<8x8xbf16, #tpu.memory_space<vmem>>, %arg13: memref<1x8xf32, #tpu.memory_space<vmem>>, %arg14: memref<2x8x8x8xf32, #tpu.memory_space<vmem>>) attributes {dimension_semantics = [#tpu.dimension_semantics<parallel>], iteration_bounds = array<i64: 1>, scalar_prefetch = 0 : i64, scratch_operands = 0 : i64, tpu.core_type = #tpu.core_type<tc>, window_params = [{transform_indices = @transform_0, window_bounds = array<i64: 2, 8, 8, 8>}, {pipeline_mode = #tpu.pipeline_mode<synchronous>, transform_indices = @transform_1, window_bounds = array<i64: 8, 16>}, {pipeline_mode = #tpu.pipeline_mode<synchronous>, transform_indices = @transform_2, window_bounds = array<i64: 1, 16>}, {pipeline_mode = #tpu.pipeline_mode<synchronous>, transform_indices = @transform_3, window_bounds = array<i64: 9, 16>}, {pipeline_mode = #tpu.pipeline_mode<synchronous>, transform_indices = @transform_4, window_bounds = array<i64: 1, 16>}, {pipeline_mode = #tpu.pipeline_mode<synchronous>, transform_indices = @transform_5, window_bounds = array<i64: 16, 4>}, {pipeline_mode = #tpu.pipeline_mode<synchronous>, transform_indices = @transform_6, window_bounds = array<i64: 1, 4>}, {pipeline_mode = #tpu.pipeline_mode<synchronous>, transform_indices = @transform_7, window_bounds = array<i64: 4, 16>}, {pipeline_mode = #tpu.pipeline_mode<synchronous>, transform_indices = @transform_8, window_bounds = array<i64: 1, 16>}, {pipeline_mode = #tpu.pipeline_mode<synchronous>, transform_indices = @transform_9, window_bounds = array<i64: 16, 8>}, {pipeline_mode = #tpu.pipeline_mode<synchronous>, transform_indices = @transform_10, window_bounds = array<i64: 1, 8>}, {pipeline_mode = #tpu.pipeline_mode<synchronous>, transform_indices = @transform_11, window_bounds = array<i64: 8, 8>}, {pipeline_mode = #tpu.pipeline_mode<synchronous>, transform_indices = @transform_12, window_bounds = array<i64: 1, 8>}, {transform_indices = @transform_13, window_bounds = array<i64: 2, 8, 8, 8>}]} {
    %c0 = arith.constant 0 : index
    %c0_0 = arith.constant 0 : index
    %c0_1 = arith.constant 0 : index
    %c0_2 = arith.constant 0 : index
    %0 = vector.load %arg1[%c0, %c0_0, %c0_1, %c0_2] : memref<2x8x8x8xbf16, #tpu.memory_space<vmem>>, vector<2x8x8x8xbf16>
    %1 = vector.shape_cast %0 : vector<2x8x8x8xbf16> to vector<128x8xbf16>
    %c0_3 = arith.constant 0 : index
    %c0_4 = arith.constant 0 : index
    %2 = vector.load %arg2[%c0_3, %c0_4] : memref<8x16xbf16, #tpu.memory_space<vmem>>, vector<8x16xbf16>
    %cst = arith.constant dense<0.000000e+00> : vector<128x16xf32>
    %3 = tpu.matmul %1, %2, %cst {dimension_numbers = #tpu.dot_dimension_numbers<[1], [0], [0], [1], [0, 0, 1, 1], [], []>} : vector<128x8xbf16>, vector<8x16xbf16>, vector<128x16xf32> -> vector<128x16xf32>
    %c0_5 = arith.constant 0 : index
    %c0_6 = arith.constant 0 : index
    %4 = vector.load %arg3[%c0_5, %c0_6] : memref<1x16xf32, #tpu.memory_space<vmem>>, vector<1x16xf32>
    %5 = vector.broadcast %4 : vector<1x16xf32> to vector<128x16xf32>
    %6 = arith.addf %3, %5 : vector<128x16xf32>
    %cst_7 = arith.constant 3.000000e+00 : f32
    %7 = vector.broadcast %cst_7 : f32 to vector<128x16xf32>
    %8 = arith.addf %6, %7 : vector<128x16xf32>
    %cst_8 = arith.constant 0.000000e+00 : f32
    %9 = vector.broadcast %cst_8 : f32 to vector<128x16xf32>
    %10 = arith.maximumf %8, %9 : vector<128x16xf32>
    %cst_9 = arith.constant 6.000000e+00 : f32
    %11 = vector.broadcast %cst_9 : f32 to vector<128x16xf32>
    %12 = arith.minimumf %10, %11 : vector<128x16xf32>
    %13 = arith.mulf %6, %12 : vector<128x16xf32>
    %cst_10 = arith.constant 0.166666672 : f32
    %14 = vector.broadcast %cst_10 : f32 to vector<128x16xf32>
    %15 = arith.mulf %13, %14 : vector<128x16xf32>
    %16 = vector.shape_cast %15 : vector<128x16xf32> to vector<2x8x8x16xf32>
    %c0_11 = arith.constant 0 : index
    %c0_12 = arith.constant 0 : index
    %17 = vector.load %arg4[%c0_11, %c0_12] : memref<9x16xbf16, #tpu.memory_space<vmem>>, vector<9x16xbf16>
    %18 = arith.extf %17 : vector<9x16xbf16> to vector<9x16xf32>
    %19 = tpu.iota {dimensions = array<i32: 2>} : vector<2x8x8x16xi32>
    %c1_i32 = arith.constant 1 : i32
    %20 = tpu.dynamic_rotate %16 by %c1_i32 dim 2 : vector<2x8x8x16xf32>, i32 -> vector<2x8x8x16xf32>
    %c-1_i32 = arith.constant -1 : i32
    %21 = vector.broadcast %c-1_i32 : i32 to vector<2x8x8x16xi32>
    %22 = arith.addi %19, %21 : vector<2x8x8x16xi32>
    %c0_i32 = arith.constant 0 : i32
    %23 = vector.broadcast %c0_i32 : i32 to vector<2x8x8x16xi32>
    %24 = arith.cmpi sge, %22, %23 : vector<2x8x8x16xi32>
    %c-1_i32_13 = arith.constant -1 : i32
    %25 = vector.broadcast %c-1_i32_13 : i32 to vector<2x8x8x16xi32>
    %26 = arith.addi %19, %25 : vector<2x8x8x16xi32>
    %c8_i32 = arith.constant 8 : i32
    %27 = vector.broadcast %c8_i32 : i32 to vector<2x8x8x16xi32>
    %28 = arith.cmpi slt, %26, %27 : vector<2x8x8x16xi32>
    %29 = arith.andi %24, %28 : vector<2x8x8x16xi1>
    %cst_14 = arith.constant 0.000000e+00 : f32
    %30 = vector.broadcast %cst_14 : f32 to vector<2x8x8x16xf32>
    %31 = arith.select %29, %20, %30 : vector<2x8x8x16xi1>, vector<2x8x8x16xf32>
    %c7_i32 = arith.constant 7 : i32
    %32 = tpu.dynamic_rotate %16 by %c7_i32 dim 2 : vector<2x8x8x16xf32>, i32 -> vector<2x8x8x16xf32>
    %c1_i32_15 = arith.constant 1 : i32
    %33 = vector.broadcast %c1_i32_15 : i32 to vector<2x8x8x16xi32>
    %34 = arith.addi %19, %33 : vector<2x8x8x16xi32>
    %c0_i32_16 = arith.constant 0 : i32
    %35 = vector.broadcast %c0_i32_16 : i32 to vector<2x8x8x16xi32>
    %36 = arith.cmpi sge, %34, %35 : vector<2x8x8x16xi32>
    %c1_i32_17 = arith.constant 1 : i32
    %37 = vector.broadcast %c1_i32_17 : i32 to vector<2x8x8x16xi32>
    %38 = arith.addi %19, %37 : vector<2x8x8x16xi32>
    %c8_i32_18 = arith.constant 8 : i32
    %39 = vector.broadcast %c8_i32_18 : i32 to vector<2x8x8x16xi32>
    %40 = arith.cmpi slt, %38, %39 : vector<2x8x8x16xi32>
    %41 = arith.andi %36, %40 : vector<2x8x8x16xi1>
    %cst_19 = arith.constant 0.000000e+00 : f32
    %42 = vector.broadcast %cst_19 : f32 to vector<2x8x8x16xf32>
    %43 = arith.select %41, %32, %42 : vector<2x8x8x16xi1>, vector<2x8x8x16xf32>
    %cst_20 = arith.constant 0.000000e+00 : f32
    %44 = vector.broadcast %cst_20 : f32 to vector<2x8x8x16xf32>
    %cst_21 = arith.constant 0.000000e+00 : f32
    %45 = vector.broadcast %cst_21 : f32 to vector<2x1x8x16xf32>
    %46 = vector.extract_strided_slice %31 {offsets = [0, 0, 0, 0], sizes = [2, 7, 8, 16], strides = [1, 1, 1, 1]} : vector<2x8x8x16xf32> to vector<2x7x8x16xf32>
    %47 = tpu.concatenate %45, %46 in 1 : vector<2x1x8x16xf32>, vector<2x7x8x16xf32> -> vector<2x8x8x16xf32>
    %48 = vector.extract_strided_slice %18 {offsets = [0, 0], sizes = [1, 16], strides = [1, 1]} : vector<9x16xf32> to vector<1x16xf32>
    %49 = vector.shape_cast %48 : vector<1x16xf32> to vector<1x1x1x16xf32>
    %50 = vector.broadcast %49 : vector<1x1x1x16xf32> to vector<2x8x8x16xf32>
    %51 = arith.mulf %47, %50 : vector<2x8x8x16xf32>
    %52 = arith.addf %44, %51 : vector<2x8x8x16xf32>
    %cst_22 = arith.constant 0.000000e+00 : f32
    %53 = vector.broadcast %cst_22 : f32 to vector<2x1x8x16xf32>
    %54 = vector.extract_strided_slice %16 {offsets = [0, 0, 0, 0], sizes = [2, 7, 8, 16], strides = [1, 1, 1, 1]} : vector<2x8x8x16xf32> to vector<2x7x8x16xf32>
    %55 = tpu.concatenate %53, %54 in 1 : vector<2x1x8x16xf32>, vector<2x7x8x16xf32> -> vector<2x8x8x16xf32>
    %56 = vector.extract_strided_slice %18 {offsets = [1, 0], sizes = [1, 16], strides = [1, 1]} : vector<9x16xf32> to vector<1x16xf32>
    %57 = vector.shape_cast %56 : vector<1x16xf32> to vector<1x1x1x16xf32>
    %58 = vector.broadcast %57 : vector<1x1x1x16xf32> to vector<2x8x8x16xf32>
    %59 = arith.mulf %55, %58 : vector<2x8x8x16xf32>
    %60 = arith.addf %52, %59 : vector<2x8x8x16xf32>
    %cst_23 = arith.constant 0.000000e+00 : f32
    %61 = vector.broadcast %cst_23 : f32 to vector<2x1x8x16xf32>
    %62 = vector.extract_strided_slice %43 {offsets = [0, 0, 0, 0], sizes = [2, 7, 8, 16], strides = [1, 1, 1, 1]} : vector<2x8x8x16xf32> to vector<2x7x8x16xf32>
    %63 = tpu.concatenate %61, %62 in 1 : vector<2x1x8x16xf32>, vector<2x7x8x16xf32> -> vector<2x8x8x16xf32>
    %64 = vector.extract_strided_slice %18 {offsets = [2, 0], sizes = [1, 16], strides = [1, 1]} : vector<9x16xf32> to vector<1x16xf32>
    %65 = vector.shape_cast %64 : vector<1x16xf32> to vector<1x1x1x16xf32>
    %66 = vector.broadcast %65 : vector<1x1x1x16xf32> to vector<2x8x8x16xf32>
    %67 = arith.mulf %63, %66 : vector<2x8x8x16xf32>
    %68 = arith.addf %60, %67 : vector<2x8x8x16xf32>
    %69 = vector.extract_strided_slice %18 {offsets = [3, 0], sizes = [1, 16], strides = [1, 1]} : vector<9x16xf32> to vector<1x16xf32>
    %70 = vector.shape_cast %69 : vector<1x16xf32> to vector<1x1x1x16xf32>
    %71 = vector.broadcast %70 : vector<1x1x1x16xf32> to vector<2x8x8x16xf32>
    %72 = arith.mulf %31, %71 : vector<2x8x8x16xf32>
    %73 = arith.addf %68, %72 : vector<2x8x8x16xf32>
    %74 = vector.extract_strided_slice %18 {offsets = [4, 0], sizes = [1, 16], strides = [1, 1]} : vector<9x16xf32> to vector<1x16xf32>
    %75 = vector.shape_cast %74 : vector<1x16xf32> to vector<1x1x1x16xf32>
    %76 = vector.broadcast %75 : vector<1x1x1x16xf32> to vector<2x8x8x16xf32>
    %77 = arith.mulf %16, %76 : vector<2x8x8x16xf32>
    %78 = arith.addf %73, %77 : vector<2x8x8x16xf32>
    %79 = vector.extract_strided_slice %18 {offsets = [5, 0], sizes = [1, 16], strides = [1, 1]} : vector<9x16xf32> to vector<1x16xf32>
    %80 = vector.shape_cast %79 : vector<1x16xf32> to vector<1x1x1x16xf32>
    %81 = vector.broadcast %80 : vector<1x1x1x16xf32> to vector<2x8x8x16xf32>
    %82 = arith.mulf %43, %81 : vector<2x8x8x16xf32>
    %83 = arith.addf %78, %82 : vector<2x8x8x16xf32>
    %84 = vector.extract_strided_slice %31 {offsets = [0, 1, 0, 0], sizes = [2, 7, 8, 16], strides = [1, 1, 1, 1]} : vector<2x8x8x16xf32> to vector<2x7x8x16xf32>
    %cst_24 = arith.constant 0.000000e+00 : f32
    %85 = vector.broadcast %cst_24 : f32 to vector<2x1x8x16xf32>
    %86 = tpu.concatenate %84, %85 in 1 : vector<2x7x8x16xf32>, vector<2x1x8x16xf32> -> vector<2x8x8x16xf32>
    %87 = vector.extract_strided_slice %18 {offsets = [6, 0], sizes = [1, 16], strides = [1, 1]} : vector<9x16xf32> to vector<1x16xf32>
    %88 = vector.shape_cast %87 : vector<1x16xf32> to vector<1x1x1x16xf32>
    %89 = vector.broadcast %88 : vector<1x1x1x16xf32> to vector<2x8x8x16xf32>
    %90 = arith.mulf %86, %89 : vector<2x8x8x16xf32>
    %91 = arith.addf %83, %90 : vector<2x8x8x16xf32>
    %92 = vector.extract_strided_slice %16 {offsets = [0, 1, 0, 0], sizes = [2, 7, 8, 16], strides = [1, 1, 1, 1]} : vector<2x8x8x16xf32> to vector<2x7x8x16xf32>
    %cst_25 = arith.constant 0.000000e+00 : f32
    %93 = vector.broadcast %cst_25 : f32 to vector<2x1x8x16xf32>
    %94 = tpu.concatenate %92, %93 in 1 : vector<2x7x8x16xf32>, vector<2x1x8x16xf32> -> vector<2x8x8x16xf32>
    %95 = vector.extract_strided_slice %18 {offsets = [7, 0], sizes = [1, 16], strides = [1, 1]} : vector<9x16xf32> to vector<1x16xf32>
    %96 = vector.shape_cast %95 : vector<1x16xf32> to vector<1x1x1x16xf32>
    %97 = vector.broadcast %96 : vector<1x1x1x16xf32> to vector<2x8x8x16xf32>
    %98 = arith.mulf %94, %97 : vector<2x8x8x16xf32>
    %99 = arith.addf %91, %98 : vector<2x8x8x16xf32>
    %100 = vector.extract_strided_slice %43 {offsets = [0, 1, 0, 0], sizes = [2, 7, 8, 16], strides = [1, 1, 1, 1]} : vector<2x8x8x16xf32> to vector<2x7x8x16xf32>
    %cst_26 = arith.constant 0.000000e+00 : f32
    %101 = vector.broadcast %cst_26 : f32 to vector<2x1x8x16xf32>
    %102 = tpu.concatenate %100, %101 in 1 : vector<2x7x8x16xf32>, vector<2x1x8x16xf32> -> vector<2x8x8x16xf32>
    %103 = vector.extract_strided_slice %18 {offsets = [8, 0], sizes = [1, 16], strides = [1, 1]} : vector<9x16xf32> to vector<1x16xf32>
    %104 = vector.shape_cast %103 : vector<1x16xf32> to vector<1x1x1x16xf32>
    %105 = vector.broadcast %104 : vector<1x1x1x16xf32> to vector<2x8x8x16xf32>
    %106 = arith.mulf %102, %105 : vector<2x8x8x16xf32>
    %107 = arith.addf %99, %106 : vector<2x8x8x16xf32>
    %c0_27 = arith.constant 0 : index
    %c0_28 = arith.constant 0 : index
    %108 = vector.load %arg5[%c0_27, %c0_28] : memref<1x16xf32, #tpu.memory_space<vmem>>, vector<1x16xf32>
    %109 = vector.shape_cast %108 : vector<1x16xf32> to vector<1x1x1x16xf32>
    %110 = vector.broadcast %109 : vector<1x1x1x16xf32> to vector<2x8x8x16xf32>
    %111 = arith.addf %107, %110 : vector<2x8x8x16xf32>
    %cst_29 = arith.constant 3.000000e+00 : f32
    %112 = vector.broadcast %cst_29 : f32 to vector<2x8x8x16xf32>
    %113 = arith.addf %111, %112 : vector<2x8x8x16xf32>
    %cst_30 = arith.constant 0.000000e+00 : f32
    %114 = vector.broadcast %cst_30 : f32 to vector<2x8x8x16xf32>
    %115 = arith.maximumf %113, %114 : vector<2x8x8x16xf32>
    %cst_31 = arith.constant 6.000000e+00 : f32
    %116 = vector.broadcast %cst_31 : f32 to vector<2x8x8x16xf32>
    %117 = arith.minimumf %115, %116 : vector<2x8x8x16xf32>
    %118 = arith.mulf %111, %117 : vector<2x8x8x16xf32>
    %cst_32 = arith.constant 0.166666672 : f32
    %119 = vector.broadcast %cst_32 : f32 to vector<2x8x8x16xf32>
    %120 = arith.mulf %118, %119 : vector<2x8x8x16xf32>
    %cst_33 = arith.constant dense<0.000000e+00> : vector<2x8x16xf32>
    %121 = vector.multi_reduction <add>, %120, %cst_33 [1] : vector<2x8x8x16xf32> to vector<2x8x16xf32>
    %cst_34 = arith.constant dense<0.000000e+00> : vector<2x16xf32>
    %122 = vector.multi_reduction <add>, %121, %cst_34 [1] : vector<2x8x16xf32> to vector<2x16xf32>
    %cst_35 = arith.constant 1.562500e-02 : f32
    %123 = vector.broadcast %cst_35 : f32 to vector<2x16xf32>
    %124 = arith.mulf %122, %123 : vector<2x16xf32>
    %125 = arith.truncf %124 : vector<2x16xf32> to vector<2x16xbf16>
    %c0_36 = arith.constant 0 : index
    %c0_37 = arith.constant 0 : index
    %126 = vector.load %arg6[%c0_36, %c0_37] : memref<16x4xbf16, #tpu.memory_space<vmem>>, vector<16x4xbf16>
    %cst_38 = arith.constant dense<0.000000e+00> : vector<2x4xf32>
    %127 = tpu.matmul %125, %126, %cst_38 {dimension_numbers = #tpu.dot_dimension_numbers<[1], [0], [0], [1], [0, 0, 1, 1], [], []>} : vector<2x16xbf16>, vector<16x4xbf16>, vector<2x4xf32> -> vector<2x4xf32>
    %c0_39 = arith.constant 0 : index
    %c0_40 = arith.constant 0 : index
    %128 = vector.load %arg7[%c0_39, %c0_40] : memref<1x4xf32, #tpu.memory_space<vmem>>, vector<1x4xf32>
    %129 = vector.broadcast %128 : vector<1x4xf32> to vector<2x4xf32>
    %130 = arith.addf %127, %129 : vector<2x4xf32>
    %cst_41 = arith.constant 0.000000e+00 : f32
    %131 = vector.broadcast %cst_41 : f32 to vector<2x4xf32>
    %132 = arith.maximumf %130, %131 : vector<2x4xf32>
    %cst_42 = arith.constant 6.000000e+00 : f32
    %133 = vector.broadcast %cst_42 : f32 to vector<2x4xf32>
    %134 = arith.minimumf %132, %133 : vector<2x4xf32>
    %135 = arith.truncf %134 : vector<2x4xf32> to vector<2x4xbf16>
    %c0_43 = arith.constant 0 : index
    %c0_44 = arith.constant 0 : index
    %136 = vector.load %arg8[%c0_43, %c0_44] : memref<4x16xbf16, #tpu.memory_space<vmem>>, vector<4x16xbf16>
    %cst_45 = arith.constant dense<0.000000e+00> : vector<2x16xf32>
    %137 = tpu.matmul %135, %136, %cst_45 {dimension_numbers = #tpu.dot_dimension_numbers<[1], [0], [0], [1], [0, 0, 1, 1], [], []>} : vector<2x4xbf16>, vector<4x16xbf16>, vector<2x16xf32> -> vector<2x16xf32>
    %c0_46 = arith.constant 0 : index
    %c0_47 = arith.constant 0 : index
    %138 = vector.load %arg9[%c0_46, %c0_47] : memref<1x16xf32, #tpu.memory_space<vmem>>, vector<1x16xf32>
    %139 = vector.broadcast %138 : vector<1x16xf32> to vector<2x16xf32>
    %140 = arith.addf %137, %139 : vector<2x16xf32>
    %cst_48 = arith.constant 3.000000e+00 : f32
    %141 = vector.broadcast %cst_48 : f32 to vector<2x16xf32>
    %142 = arith.addf %140, %141 : vector<2x16xf32>
    %cst_49 = arith.constant 0.000000e+00 : f32
    %143 = vector.broadcast %cst_49 : f32 to vector<2x16xf32>
    %144 = arith.maximumf %142, %143 : vector<2x16xf32>
    %cst_50 = arith.constant 6.000000e+00 : f32
    %145 = vector.broadcast %cst_50 : f32 to vector<2x16xf32>
    %146 = arith.minimumf %144, %145 : vector<2x16xf32>
    %147 = arith.mulf %140, %146 : vector<2x16xf32>
    %cst_51 = arith.constant 0.166666672 : f32
    %148 = vector.broadcast %cst_51 : f32 to vector<2x16xf32>
    %149 = arith.mulf %147, %148 : vector<2x16xf32>
    %150 = vector.shape_cast %149 : vector<2x16xf32> to vector<2x1x1x16xf32>
    %151 = vector.broadcast %150 : vector<2x1x1x16xf32> to vector<2x8x8x16xf32>
    %152 = arith.mulf %120, %151 : vector<2x8x8x16xf32>
    %153 = vector.shape_cast %152 : vector<2x8x8x16xf32> to vector<128x16xf32>
    %154 = arith.truncf %153 : vector<128x16xf32> to vector<128x16xbf16>
    %c0_52 = arith.constant 0 : index
    %c0_53 = arith.constant 0 : index
    %155 = vector.load %arg10[%c0_52, %c0_53] : memref<16x8xbf16, #tpu.memory_space<vmem>>, vector<16x8xbf16>
    %cst_54 = arith.constant dense<0.000000e+00> : vector<128x8xf32>
    %156 = tpu.matmul %154, %155, %cst_54 {dimension_numbers = #tpu.dot_dimension_numbers<[1], [0], [0], [1], [0, 0, 1, 1], [], []>} : vector<128x16xbf16>, vector<16x8xbf16>, vector<128x8xf32> -> vector<128x8xf32>
    %c0_55 = arith.constant 0 : index
    %c0_56 = arith.constant 0 : index
    %157 = vector.load %arg11[%c0_55, %c0_56] : memref<1x8xf32, #tpu.memory_space<vmem>>, vector<1x8xf32>
    %158 = vector.broadcast %157 : vector<1x8xf32> to vector<128x8xf32>
    %159 = arith.addf %156, %158 : vector<128x8xf32>
    %cst_57 = arith.constant 3.000000e+00 : f32
    %160 = vector.broadcast %cst_57 : f32 to vector<128x8xf32>
    %161 = arith.addf %159, %160 : vector<128x8xf32>
    %cst_58 = arith.constant 0.000000e+00 : f32
    %162 = vector.broadcast %cst_58 : f32 to vector<128x8xf32>
    %163 = arith.maximumf %161, %162 : vector<128x8xf32>
    %cst_59 = arith.constant 6.000000e+00 : f32
    %164 = vector.broadcast %cst_59 : f32 to vector<128x8xf32>
    %165 = arith.minimumf %163, %164 : vector<128x8xf32>
    %166 = arith.mulf %159, %165 : vector<128x8xf32>
    %cst_60 = arith.constant 0.166666672 : f32
    %167 = vector.broadcast %cst_60 : f32 to vector<128x8xf32>
    %168 = arith.mulf %166, %167 : vector<128x8xf32>
    %c0_61 = arith.constant 0 : index
    %c0_62 = arith.constant 0 : index
    %169 = vector.load %arg12[%c0_61, %c0_62] : memref<8x8xbf16, #tpu.memory_space<vmem>>, vector<8x8xbf16>
    %cst_63 = arith.constant dense<0.000000e+00> : vector<128x8xf32>
    %170 = tpu.matmul %1, %169, %cst_63 {dimension_numbers = #tpu.dot_dimension_numbers<[1], [0], [0], [1], [0, 0, 1, 1], [], []>} : vector<128x8xbf16>, vector<8x8xbf16>, vector<128x8xf32> -> vector<128x8xf32>
    %171 = arith.addf %168, %170 : vector<128x8xf32>
    %c0_64 = arith.constant 0 : index
    %c0_65 = arith.constant 0 : index
    %172 = vector.load %arg13[%c0_64, %c0_65] : memref<1x8xf32, #tpu.memory_space<vmem>>, vector<1x8xf32>
    %173 = vector.broadcast %172 : vector<1x8xf32> to vector<128x8xf32>
    %174 = arith.addf %171, %173 : vector<128x8xf32>
    %175 = vector.shape_cast %174 : vector<128x8xf32> to vector<2x8x8x8xf32>
    %c0_66 = arith.constant 0 : index
    %c0_67 = arith.constant 0 : index
    %c0_68 = arith.constant 0 : index
    %c0_69 = arith.constant 0 : index
    %176 = vector.load %arg14[%c0_66, %c0_67, %c0_68, %c0_69] : memref<2x8x8x8xf32, #tpu.memory_space<vmem>>, vector<2x8x8x8xf32>
    tpu.vector_store %arg14[%c0_66, %c0_67, %c0_68, %c0_69], %175 {strides = array<i32>} : memref<2x8x8x8xf32, #tpu.memory_space<vmem>>, vector<2x8x8x8xf32>,
    return
  }
  func.func @transform_0(%arg0: i32) -> (i32, i32, i32, i32) {
    %c0_i32 = arith.constant 0 : i32
    %c0_i32_0 = arith.constant 0 : i32
    %c0_i32_1 = arith.constant 0 : i32
    %c0_i32_2 = arith.constant 0 : i32
    return %arg0, %c0_i32, %c0_i32_0, %c0_i32_1 : i32, i32, i32, i32
  }
  func.func @transform_1(%arg0: i32) -> (i32, i32) {
    %c0_i32 = arith.constant 0 : i32
    %c0_i32_0 = arith.constant 0 : i32
    %c0_i32_1 = arith.constant 0 : i32
    return %c0_i32, %c0_i32_0 : i32, i32
  }
  func.func @transform_2(%arg0: i32) -> (i32, i32) {
    %c0_i32 = arith.constant 0 : i32
    %c0_i32_0 = arith.constant 0 : i32
    %c0_i32_1 = arith.constant 0 : i32
    return %c0_i32, %c0_i32_0 : i32, i32
  }
  func.func @transform_3(%arg0: i32) -> (i32, i32) {
    %c0_i32 = arith.constant 0 : i32
    %c0_i32_0 = arith.constant 0 : i32
    %c0_i32_1 = arith.constant 0 : i32
    return %c0_i32, %c0_i32_0 : i32, i32
  }
  func.func @transform_4(%arg0: i32) -> (i32, i32) {
    %c0_i32 = arith.constant 0 : i32
    %c0_i32_0 = arith.constant 0 : i32
    %c0_i32_1 = arith.constant 0 : i32
    return %c0_i32, %c0_i32_0 : i32, i32
  }
  func.func @transform_5(%arg0: i32) -> (i32, i32) {
    %c0_i32 = arith.constant 0 : i32
    %c0_i32_0 = arith.constant 0 : i32
    %c0_i32_1 = arith.constant 0 : i32
    return %c0_i32, %c0_i32_0 : i32, i32
  }
  func.func @transform_6(%arg0: i32) -> (i32, i32) {
    %c0_i32 = arith.constant 0 : i32
    %c0_i32_0 = arith.constant 0 : i32
    %c0_i32_1 = arith.constant 0 : i32
    return %c0_i32, %c0_i32_0 : i32, i32
  }
  func.func @transform_7(%arg0: i32) -> (i32, i32) {
    %c0_i32 = arith.constant 0 : i32
    %c0_i32_0 = arith.constant 0 : i32
    %c0_i32_1 = arith.constant 0 : i32
    return %c0_i32, %c0_i32_0 : i32, i32
  }
  func.func @transform_8(%arg0: i32) -> (i32, i32) {
    %c0_i32 = arith.constant 0 : i32
    %c0_i32_0 = arith.constant 0 : i32
    %c0_i32_1 = arith.constant 0 : i32
    return %c0_i32, %c0_i32_0 : i32, i32
  }
  func.func @transform_9(%arg0: i32) -> (i32, i32) {
    %c0_i32 = arith.constant 0 : i32
    %c0_i32_0 = arith.constant 0 : i32
    %c0_i32_1 = arith.constant 0 : i32
    return %c0_i32, %c0_i32_0 : i32, i32
  }
  func.func @transform_10(%arg0: i32) -> (i32, i32) {
    %c0_i32 = arith.constant 0 : i32
    %c0_i32_0 = arith.constant 0 : i32
    %c0_i32_1 = arith.constant 0 : i32
    return %c0_i32, %c0_i32_0 : i32, i32
  }
  func.func @transform_11(%arg0: i32) -> (i32, i32) {
    %c0_i32 = arith.constant 0 : i32
    %c0_i32_0 = arith.constant 0 : i32
    %c0_i32_1 = arith.constant 0 : i32
    return %c0_i32, %c0_i32_0 : i32, i32
  }
  func.func @transform_12(%arg0: i32) -> (i32, i32) {
    %c0_i32 = arith.constant 0 : i32
    %c0_i32_0 = arith.constant 0 : i32
    %c0_i32_1 = arith.constant 0 : i32
    return %c0_i32, %c0_i32_0 : i32, i32
  }
  func.func @transform_13(%arg0: i32) -> (i32, i32, i32, i32) {
    %c0_i32 = arith.constant 0 : i32
    %c0_i32_0 = arith.constant 0 : i32
    %c0_i32_1 = arith.constant 0 : i32
    %c0_i32_2 = arith.constant 0 : i32
    return %arg0, %c0_i32, %c0_i32_0, %c0_i32_1 : i32, i32, i32, i32
  }
}

</mosaic_0001>

<llo_original>
// kernel: tpu_custom_call.1
$region0: #{tpu_custom_call.1}
  #allocation0 [shape = 'u32[]', space=smem, size = 0x4, offset = 0x4, fixed_abs, tag = 'smem constant byte address 0x4 - core index']
  #allocation1 [shape = 'u32[72,128]{1,0:T(1,128)}', space=vmem, size = 0x9000, scoped, tag = 'internal scratch']
  %s0 = inlined_call_operand.hbm [shape: bf16[2,8,8,8], index: 0, kind: input, shape index: {}]
  %s1 = inlined_call_operand.vmem [shape: bf16[8,16], index: 1, kind: input, shape index: {}]
  %s2 = inlined_call_operand.vmem [shape: f32[1,16], index: 2, kind: input, shape index: {}]
  %s3 = inlined_call_operand.vmem [shape: bf16[9,16], index: 3, kind: input, shape index: {}]
  %s4 = inlined_call_operand.hbm [shape: f32[1,16], index: 4, kind: input, shape index: {}]
  %s5 = inlined_call_operand.vmem [shape: bf16[16,4], index: 5, kind: input, shape index: {}]
  %s6 = inlined_call_operand.vmem [shape: f32[1,4], index: 6, kind: input, shape index: {}]
  %s7 = inlined_call_operand.vmem [shape: bf16[4,16], index: 7, kind: input, shape index: {}]
  %s8 = inlined_call_operand.vmem [shape: f32[1,16], index: 8, kind: input, shape index: {}]
  %s9 = inlined_call_operand.vmem [shape: bf16[16,8], index: 9, kind: input, shape index: {}]
  %s10 = inlined_call_operand.vmem [shape: f32[1,8], index: 10, kind: input, shape index: {}]
  %s11 = inlined_call_operand.vmem [shape: bf16[8,8], index: 11, kind: input, shape index: {}]
  %s12 = inlined_call_operand.vmem [shape: f32[1,8], index: 12, kind: input, shape index: {}]
  %s13 = inlined_call_operand.hbm [shape: f32[2,8,8,8], index: 13, kind: output, shape index: {}]
  %s14 = sld [smem:[#allocation0]]
  $region70: #{tpu_custom_call.1} parent=0
    _
  %s16 = ssub.s32 1, %s14
  %s17 = scalar_select 0, %s16, %s14
  $region1: #{tpu_custom_call.1} parent=0
    #allocation2 [shape = 'u8[32768]{0}', space=vmem, size = 0x8000, scoped, tag = 'input window, operand 0, single buffered']
    #allocation3 [shape = 's32[1]{0}', space=sflag, size = 0x4, scoped, tag = 'scoped memory for tpu_custom_call.1']
    #allocation4 [shape = 's32[1]{0}', space=sflag, size = 0x4, scoped, tag = 'scoped memory for tpu_custom_call.1']
    #allocation5 [shape = 'u8[512]{0}', space=vmem, size = 0x400, scoped, tag = 'input window, operand 4, single buffered']
    #allocation6 [shape = 's32[1]{0}', space=sflag, size = 0x4, scoped, tag = 'scoped memory for tpu_custom_call.1']
    #allocation7 [shape = 'u8[65536]{0}', space=vmem, size = 0x10000, scoped, tag = 'output window, operand 0, single buffered']
    %18 = vsyncpa [#allocation3], 0
    %19 = vsyncpa [#allocation6], 0
    %20 = vsyncpa [#allocation4], 0
    // Predicated region
    $region2: #{tpu_custom_call.1} parent=1 // pred_check
      _
    $region3: #{tpu_custom_call.1} parent=1 // pred_check_branch
      %22 = sbr.rel (0) target = $region5
    $region4: #{tpu_custom_call.1} parent=1 // pred_region
      %24 = vsyncadd [#allocation3], 0
      %s25 = sshll.u32 %s0, 4
      %s26 = int_to_ptr.hbm [resolvable:$true] %s25
      %s27 = sshll.u32 [#allocation2], 4
      %s28 = int_to_ptr.vmem [resolvable:$true] %s27
      %33 = dma.hbm_to_vmem [thread:$0]  %s26, 1024, %s28, [#allocation3], 64, 64, 4
    $region5: #{tpu_custom_call.1} parent=1 // pred_fallthru
      _
    // Predicated region
    $region6: #{tpu_custom_call.1} parent=1 // pred_check
      _
    $region7: #{tpu_custom_call.1} parent=1 // pred_check_branch
      %35 = sbr.rel (0) target = $region9
    $region8: #{tpu_custom_call.1} parent=1 // pred_region
      _
    $region9: #{tpu_custom_call.1} parent=1 // pred_fallthru
      _
    // Predicated region
    $region10: #{tpu_custom_call.1} parent=1 // pred_check
      _
    $region11: #{tpu_custom_call.1} parent=1 // pred_check_branch
      %37 = sbr.rel (0) target = $region13
    $region12: #{tpu_custom_call.1} parent=1 // pred_region
      _
    $region13: #{tpu_custom_call.1} parent=1 // pred_fallthru
      _
    // Predicated region
    $region14: #{tpu_custom_call.1} parent=1 // pred_check
      _
    $region15: #{tpu_custom_call.1} parent=1 // pred_check_branch
      %39 = sbr.rel (0) target = $region17
    $region16: #{tpu_custom_call.1} parent=1 // pred_region
      _
    $region17: #{tpu_custom_call.1} parent=1 // pred_fallthru
      _
    // Predicated region
    $region18: #{tpu_custom_call.1} parent=1 // pred_check
      _
    $region19: #{tpu_custom_call.1} parent=1 // pred_check_branch
      %41 = sbr.rel (0) target = $region21
    $region20: #{tpu_custom_call.1} parent=1 // pred_region
      %43 = vsyncadd [#allocation6], 0
      %s45 = sshll.u32 %s4, 4
      %s46 = int_to_ptr.hbm [resolvable:$true] %s45
      %s47 = sshll.u32 [#allocation5], 4
      %s48 = int_to_ptr.vmem [resolvable:$true] %s47
      %50 = dma.hbm_to_vmem [thread:$0]  %s46, 16, %s48, [#allocation6]
    $region21: #{tpu_custom_call.1} parent=1 // pred_fallthru
      _
    // Predicated region
    $region22: #{tpu_custom_call.1} parent=1 // pred_check
      _
    $region23: #{tpu_custom_call.1} parent=1 // pred_check_branch
      %52 = sbr.rel (0) target = $region25
    $region24: #{tpu_custom_call.1} parent=1 // pred_region
      _
    $region25: #{tpu_custom_call.1} parent=1 // pred_fallthru
      _
    // Predicated region
    $region26: #{tpu_custom_call.1} parent=1 // pred_check
      _
    $region27: #{tpu_custom_call.1} parent=1 // pred_check_branch
      %54 = sbr.rel (0) target = $region29
    $region28: #{tpu_custom_call.1} parent=1 // pred_region
      _
    $region29: #{tpu_custom_call.1} parent=1 // pred_fallthru
      _
    // Predicated region
    $region30: #{tpu_custom_call.1} parent=1 // pred_check
      _
    $region31: #{tpu_custom_call.1} parent=1 // pred_check_branch
      %56 = sbr.rel (0) target = $region33
    $region32: #{tpu_custom_call.1} parent=1 // pred_region
      _
    $region33: #{tpu_custom_call.1} parent=1 // pred_fallthru
      _
    // Predicated region
    $region34: #{tpu_custom_call.1} parent=1 // pred_check
      _
    $region35: #{tpu_custom_call.1} parent=1 // pred_check_branch
      %58 = sbr.rel (0) target = $region37
    $region36: #{tpu_custom_call.1} parent=1 // pred_region
      _
    $region37: #{tpu_custom_call.1} parent=1 // pred_fallthru
      _
    // Predicated region
    $region38: #{tpu_custom_call.1} parent=1 // pred_check
      _
    $region39: #{tpu_custom_call.1} parent=1 // pred_check_branch
      %60 = sbr.rel (0) target = $region41
    $region40: #{tpu_custom_call.1} parent=1 // pred_region
      _
    $region41: #{tpu_custom_call.1} parent=1 // pred_fallthru
      _
    // Predicated region
    $region42: #{tpu_custom_call.1} parent=1 // pred_check
      _
    $region43: #{tpu_custom_call.1} parent=1 // pred_check_branch
      %62 = sbr.rel (0) target = $region45
    $region44: #{tpu_custom_call.1} parent=1 // pred_region
      _
    $region45: #{tpu_custom_call.1} parent=1 // pred_fallthru
      _
    // Predicated region
    $region46: #{tpu_custom_call.1} parent=1 // pred_check
      _
    $region47: #{tpu_custom_call.1} parent=1 // pred_check_branch
      %64 = sbr.rel (0) target = $region49
    $region48: #{tpu_custom_call.1} parent=1 // pred_region
      _
    $region49: #{tpu_custom_call.1} parent=1 // pred_fallthru
      _
    // Predicated region
    $region50: #{tpu_custom_call.1} parent=1 // pred_check
      _
    $region51: #{tpu_custom_call.1} parent=1 // pred_check_branch
      %66 = sbr.rel (0) target = $region53
    $region52: #{tpu_custom_call.1} parent=1 // pred_region
      _
    $region53: #{tpu_custom_call.1} parent=1 // pred_fallthru
      _
    // Predicated region
    $region54: #{tpu_custom_call.1} parent=1 // pred_check
      _
    $region55: #{tpu_custom_call.1} parent=1 // pred_check_branch
      %68 = sbr.rel (0) target = $region57
    $region56: #{tpu_custom_call.1} parent=1 // pred_region
      %70 = dma.done [#allocation3], 1024
    $region57: #{tpu_custom_call.1} parent=1 // pred_fallthru
      _
    // Predicated region
    $region58: #{tpu_custom_call.1} parent=1 // pred_check
      _
    $region59: #{tpu_custom_call.1} parent=1 // pred_check_branch
      %72 = sbr.rel (0) target = $region61
    $region60: #{tpu_custom_call.1} parent=1 // pred_region
      %74 = dma.done [#allocation6], 16
    $region61: #{tpu_custom_call.1} parent=1 // pred_fallthru
      _
    %v76 = vld [vmem:[#allocation2] sm:$0xf]
    %v77 = vld [vmem:[#allocation2 + $0x4] sm:$0xf]
    %v78 = vld [vmem:[#allocation2 + $0x8] sm:$0xf]
    %v79 = vld [vmem:[#allocation2 + $0xc] sm:$0xf]
    %v80 = vld [vmem:[#allocation2 + $0x10] sm:$0xf]
    %v81 = vld [vmem:[#allocation2 + $0x14] sm:$0xf]
    %v82 = vld [vmem:[#allocation2 + $0x18] sm:$0xf]
    %v83 = vld [vmem:[#allocation2 + $0x1c] sm:$0xf]
    %v84 = vld [vmem:[#allocation2 + $0x20] sm:$0xf]
    %v85 = vld [vmem:[#allocation2 + $0x24] sm:$0xf]
    %v86 = vld [vmem:[#allocation2 + $0x28] sm:$0xf]
    %v87 = vld [vmem:[#allocation2 + $0x2c] sm:$0xf]
    %v88 = vld [vmem:[#allocation2 + $0x30] sm:$0xf]
    %v89 = vld [vmem:[#allocation2 + $0x34] sm:$0xf]
    %v90 = vld [vmem:[#allocation2 + $0x38] sm:$0xf]
    %v91 = vld [vmem:[#allocation2 + $0x3c] sm:$0xf]
    %v92 = vld [vmem:[%s1] sm:$0xf]
    %v93 = vld [vmem:[%s2] sm:$0x1]
    %v95 = vperm.slane %v93, 0
    %v113 = vunpack.c.l.b16 %v76
    %v114 = vunpack.c.l.b16 %v77
    %v115 = vunpack.c.l.b16 %v78
    %v116 = vunpack.c.l.b16 %v79
    %v117 = vunpack.c.l.b16 %v80
    %v118 = vunpack.c.l.b16 %v81
    %v119 = vunpack.c.l.b16 %v82
    %v120 = vunpack.c.l.b16 %v83
    %v121 = vunpack.c.l.b16 %v84
    %v122 = vunpack.c.l.b16 %v85
    %v123 = vunpack.c.l.b16 %v86
    %v124 = vunpack.c.l.b16 %v87
    %v125 = vunpack.c.l.b16 %v88
    %v126 = vunpack.c.l.b16 %v89
    %v127 = vunpack.c.l.b16 %v90
    %v128 = vunpack.c.l.b16 %v91
    %v129 = vpack.c.b16 %v114, %v113
    %v130 = vpack.c.b16 %v116, %v115
    %v131 = vpack.c.b16 %v118, %v117
    %v132 = vpack.c.b16 %v120, %v119
    %v133 = vpack.c.b16 %v122, %v121
    %v134 = vpack.c.b16 %v124, %v123
    %v135 = vpack.c.b16 %v126, %v125
    %v136 = vpack.c.b16 %v128, %v127
    %vm137 = vcmask 64512
    %v139 = vsel %vm137, %v129, 0
    %v142 = vsel %vm137, %v130, 0
    %v145 = vsel %vm137, %v131, 0
    %v148 = vsel %vm137, %v132, 0
    %v151 = vsel %vm137, %v133, 0
    %v154 = vsel %vm137, %v134, 0
    %v157 = vsel %vm137, %v135, 0
    %v160 = vsel %vm137, %v136, 0
    %vm162 = vcmask 1043456
    %v164 = vsel %vm162, %v92, 0
    %166 = vmatpush.bf16.msra.mxu0 0
    %167 = vmatpush.bf16.msra.mxu0 0
    %168 = vmatpush.bf16.msra.mxu0 0
    %169 = vmatpush.bf16.msra.mxu0 0
    %170 = vmatpush.bf16.msra.mxu0 0
    %171 = vmatpush.bf16.msra.mxu0 0
    %172 = vmatpush.bf16.msra.mxu0 0
    %173 = vmatpush.bf16.msra.mxu0 %v164
    %174 = vmatmul.bf16.gmra.mxu0 %v139
    %v175 = vpop.f32.mrf.mxu0
    %v176 = vadd.f32 %v95, %v175
    %v177 = vpop.f32.mrf.mxu0
    %v178 = vadd.f32 %v95, %v177
    %179 = vmatmul.bf16.gmra.mxu0 %v142
    %v180 = vpop.f32.mrf.mxu0
    %v181 = vadd.f32 %v95, %v180
    %v182 = vpop.f32.mrf.mxu0
    %v183 = vadd.f32 %v95, %v182
    %184 = vmatmul.bf16.gmra.mxu0 %v145
    %v185 = vpop.f32.mrf.mxu0
    %v186 = vadd.f32 %v95, %v185
    %v187 = vpop.f32.mrf.mxu0
    %v188 = vadd.f32 %v95, %v187
    %189 = vmatmul.bf16.gmra.mxu0 %v148
    %v190 = vpop.f32.mrf.mxu0
    %v191 = vadd.f32 %v95, %v190
    %v192 = vpop.f32.mrf.mxu0
    %v193 = vadd.f32 %v95, %v192
    %194 = vmatmul.bf16.gmra.mxu0 %v151
    %v195 = vpop.f32.mrf.mxu0
    %v196 = vadd.f32 %v95, %v195
    %v197 = vpop.f32.mrf.mxu0
    %v198 = vadd.f32 %v95, %v197
    %199 = vmatmul.bf16.gmra.mxu0 %v154
    %v200 = vpop.f32.mrf.mxu0
    %v201 = vadd.f32 %v95, %v200
    %v202 = vpop.f32.mrf.mxu0
    %v203 = vadd.f32 %v95, %v202
    %204 = vmatmul.bf16.gmra.mxu0 %v157
    %v205 = vpop.f32.mrf.mxu0
    %v206 = vadd.f32 %v95, %v205
    %v207 = vpop.f32.mrf.mxu0
    %v208 = vadd.f32 %v95, %v207
    %209 = vmatmul.bf16.gmra.mxu0 %v160
    %v210 = vpop.f32.mrf.mxu0
    %v211 = vadd.f32 %v95, %v210
    %v212 = vpop.f32.mrf.mxu0
    %v213 = vadd.f32 %v95, %v212
    %214 = vdwg.mxu0
    %v215 = vadd.f32 %v176, 3.0
    %v216 = vadd.f32 %v178, 3.0
    %v217 = vadd.f32 %v181, 3.0
    %v218 = vadd.f32 %v183, 3.0
    %v219 = vadd.f32 %v186, 3.0
    %v220 = vadd.f32 %v188, 3.0
    %v221 = vadd.f32 %v191, 3.0
    %v222 = vadd.f32 %v193, 3.0
    %v223 = vadd.f32 %v196, 3.0
    %v224 = vadd.f32 %v198, 3.0
    %v225 = vadd.f32 %v201, 3.0
    %v226 = vadd.f32 %v203, 3.0
    %v227 = vadd.f32 %v206, 3.0
    %v228 = vadd.f32 %v208, 3.0
    %v229 = vadd.f32 %v211, 3.0
    %v230 = vadd.f32 %v213, 3.0
    %v231 = vmax.f32 %v215, 0.0
    %v232 = vmax.f32 %v216, 0.0
    %v233 = vmax.f32 %v217, 0.0
    %v234 = vmax.f32 %v218, 0.0
    %v235 = vmax.f32 %v219, 0.0
    %v236 = vmax.f32 %v220, 0.0
    %v237 = vmax.f32 %v221, 0.0
    %v238 = vmax.f32 %v222, 0.0
    %v239 = vmax.f32 %v223, 0.0
    %v240 = vmax.f32 %v224, 0.0
    %v241 = vmax.f32 %v225, 0.0
    %v242 = vmax.f32 %v226, 0.0
    %v243 = vmax.f32 %v227, 0.0
    %v244 = vmax.f32 %v228, 0.0
    %v245 = vmax.f32 %v229, 0.0
    %v246 = vmax.f32 %v230, 0.0
    %v247 = vmin.f32 %v231, 6.0
    %v248 = vmin.f32 %v232, 6.0
    %v249 = vmin.f32 %v233, 6.0
    %v250 = vmin.f32 %v234, 6.0
    %v251 = vmin.f32 %v235, 6.0
    %v252 = vmin.f32 %v236, 6.0
    %v253 = vmin.f32 %v237, 6.0
    %v254 = vmin.f32 %v238, 6.0
    %v255 = vmin.f32 %v239, 6.0
    %v256 = vmin.f32 %v240, 6.0
    %v257 = vmin.f32 %v241, 6.0
    %v258 = vmin.f32 %v242, 6.0
    %v259 = vmin.f32 %v243, 6.0
    %v260 = vmin.f32 %v244, 6.0
    %v261 = vmin.f32 %v245, 6.0
    %v262 = vmin.f32 %v246, 6.0
    %v263 = vmul.f32 %v176, %v247
    %v264 = vmul.f32 %v178, %v248
    %v265 = vmul.f32 %v181, %v249
    %v266 = vmul.f32 %v183, %v250
    %v267 = vmul.f32 %v186, %v251
    %v268 = vmul.f32 %v188, %v252
    %v269 = vmul.f32 %v191, %v253
    %v270 = vmul.f32 %v193, %v254
    %v271 = vmul.f32 %v196, %v255
    %v272 = vmul.f32 %v198, %v256
    %v273 = vmul.f32 %v201, %v257
    %v274 = vmul.f32 %v203, %v258
    %v275 = vmul.f32 %v206, %v259
    %v276 = vmul.f32 %v208, %v260
    %v277 = vmul.f32 %v211, %v261
    %v278 = vmul.f32 %v213, %v262
    %v279 = vmul.f32 %v263, 0.16666667
    %v280 = vmul.f32 %v264, 0.16666667
    %v281 = vmul.f32 %v265, 0.16666667
    %v282 = vmul.f32 %v266, 0.16666667
    %v283 = vmul.f32 %v267, 0.16666667
    %v284 = vmul.f32 %v268, 0.16666667
    %v285 = vmul.f32 %v269, 0.16666667
    %v286 = vmul.f32 %v270, 0.16666667
    %v287 = vmul.f32 %v271, 0.16666667
    %v288 = vmul.f32 %v272, 0.16666667
    %v289 = vmul.f32 %v273, 0.16666667
    %v290 = vmul.f32 %v274, 0.16666667
    %v291 = vmul.f32 %v275, 0.16666667
    %v292 = vmul.f32 %v276, 0.16666667
    %v293 = vmul.f32 %v277, 0.16666667
    %v294 = vmul.f32 %v278, 0.16666667
    %v295 = vld [vmem:[%s3] sm:$0xf]
    %v296 = vld [vmem:[%s3 + $0x4] sm:$0x1]
    %v297 = vunpack.c.l.bf16 %v295
    %v298 = vunpack.c.l.bf16 %v296
    %v299 = vlaneseq
    %v300 = vshrl.u32 %v299, 7
    %v301 = vrot.slane %v279, 7
    %v302 = vrot.slane %v280, 7
    %v303 = vrot.slane %v281, 7
    %v304 = vrot.slane %v282, 7
    %v305 = vrot.slane %v283, 7
    %v306 = vrot.slane %v284, 7
    %v307 = vrot.slane %v285, 7
    %v308 = vrot.slane %v286, 7
    %v309 = vrot.slane %v287, 7
    %v310 = vrot.slane %v288, 7
    %v311 = vrot.slane %v289, 7
    %v312 = vrot.slane %v290, 7
    %v313 = vrot.slane %v291, 7
    %v314 = vrot.slane %v292, 7
    %v315 = vrot.slane %v293, 7
    %v316 = vrot.slane %v294, 7
    %v317 = vadd.s32 %v300, 4294967295
    %vm318 = vcmp.ge.s32.totalorder %v317, 0
    %vm319 = vcmp.lt.s32.totalorder %v317, 8
    %vm320 = vmand %vm318, %vm319
    %v321 = vsel %vm320, %v301, 0.0
    %v322 = vsel %vm320, %v302, 0.0
    %v323 = vsel %vm320, %v303, 0.0
    %v324 = vsel %vm320, %v304, 0.0
    %v325 = vsel %vm320, %v305, 0.0
    %v326 = vsel %vm320, %v306, 0.0
    %v327 = vsel %vm320, %v307, 0.0
    %v328 = vsel %vm320, %v308, 0.0
    %v329 = vsel %vm320, %v309, 0.0
    %v330 = vsel %vm320, %v310, 0.0
    %v331 = vsel %vm320, %v311, 0.0
    %v332 = vsel %vm320, %v312, 0.0
    %v333 = vsel %vm320, %v313, 0.0
    %v334 = vsel %vm320, %v314, 0.0
    %v335 = vsel %vm320, %v315, 0.0
    %v336 = vsel %vm320, %v316, 0.0
    %v337 = vrot.slane %v279, 1
    %v338 = vrot.slane %v280, 1
    %v339 = vrot.slane %v281, 1
    %v340 = vrot.slane %v282, 1
    %v341 = vrot.slane %v283, 1
    %v342 = vrot.slane %v284, 1
    %v343 = vrot.slane %v285, 1
    %v344 = vrot.slane %v286, 1
    %v345 = vrot.slane %v287, 1
    %v346 = vrot.slane %v288, 1
    %v347 = vrot.slane %v289, 1
    %v348 = vrot.slane %v290, 1
    %v349 = vrot.slane %v291, 1
    %v350 = vrot.slane %v292, 1
    %v351 = vrot.slane %v293, 1
    %v352 = vrot.slane %v294, 1
    %v353 = vadd.s32 %v300, 1
    %vm354 = vcmp.ge.s32.totalorder %v353, 0
    %vm355 = vcmp.lt.s32.totalorder %v353, 8
    %vm356 = vmand %vm354, %vm355
    %v357 = vsel %vm356, %v337, 0.0
    %v358 = vsel %vm356, %v338, 0.0
    %v359 = vsel %vm356, %v339, 0.0
    %v360 = vsel %vm356, %v340, 0.0
    %v361 = vsel %vm356, %v341, 0.0
    %v362 = vsel %vm356, %v342, 0.0
    %v363 = vsel %vm356, %v343, 0.0
    %v364 = vsel %vm356, %v344, 0.0
    %v365 = vsel %vm356, %v345, 0.0
    %v366 = vsel %vm356, %v346, 0.0
    %v367 = vsel %vm356, %v347, 0.0
    %v368 = vsel %vm356, %v348, 0.0
    %v369 = vsel %vm356, %v349, 0.0
    %v370 = vsel %vm356, %v350, 0.0
    %v371 = vsel %vm356, %v351, 0.0
    %v372 = vsel %vm356, %v352, 0.0
    %v373 = vperm.slane %v297, 0
    %v374 = vmul.f32 %v373, 0.0
    %v375 = vmul.f32 %v321, %v373
    %v376 = vmul.f32 %v322, %v373
    %v377 = vmul.f32 %v323, %v373
    %v378 = vmul.f32 %v324, %v373
    %v379 = vmul.f32 %v325, %v373
    %v380 = vmul.f32 %v326, %v373
    %v381 = vmul.f32 %v327, %v373
    %v382 = vmul.f32 %v329, %v373
    %v383 = vmul.f32 %v330, %v373
    %v384 = vmul.f32 %v331, %v373
    %v385 = vmul.f32 %v332, %v373
    %v386 = vmul.f32 %v333, %v373
    %v387 = vmul.f32 %v334, %v373
    %v388 = vmul.f32 %v335, %v373
    %v389 = vadd.f32 %v374, 0.0
    %v390 = vadd.f32 %v375, 0.0
    %v391 = vadd.f32 %v376, 0.0
    %v392 = vadd.f32 %v377, 0.0
    %v393 = vadd.f32 %v378, 0.0
    %v394 = vadd.f32 %v379, 0.0
    %v395 = vadd.f32 %v380, 0.0
    %v396 = vadd.f32 %v381, 0.0
    %v397 = vadd.f32 %v382, 0.0
    %v398 = vadd.f32 %v383, 0.0
    %v399 = vadd.f32 %v384, 0.0
    %v400 = vadd.f32 %v385, 0.0
    %v401 = vadd.f32 %v386, 0.0
    %v402 = vadd.f32 %v387, 0.0
    %v403 = vadd.f32 %v388, 0.0
    %v404 = vperm.slane %v297, 1
    %v405 = vmul.f32 %v404, 0.0
    %v406 = vmul.f32 %v279, %v404
    %v407 = vmul.f32 %v280, %v404
    %v408 = vmul.f32 %v281, %v404
    %v409 = vmul.f32 %v282, %v404
    %v410 = vmul.f32 %v283, %v404
    %v411 = vmul.f32 %v284, %v404
    %v412 = vmul.f32 %v285, %v404
    %v413 = vmul.f32 %v287, %v404
    %v414 = vmul.f32 %v288, %v404
    %v415 = vmul.f32 %v289, %v404
    %v416 = vmul.f32 %v290, %v404
    %v417 = vmul.f32 %v291, %v404
    %v418 = vmul.f32 %v292, %v404
    %v419 = vmul.f32 %v293, %v404
    %v420 = vadd.f32 %v389, %v405
    %v421 = vadd.f32 %v390, %v406
    %v422 = vadd.f32 %v391, %v407
    %v423 = vadd.f32 %v392, %v408
    %v424 = vadd.f32 %v393, %v409
    %v425 = vadd.f32 %v394, %v410
    %v426 = vadd.f32 %v395, %v411
    %v427 = vadd.f32 %v396, %v412
    %v428 = vadd.f32 %v397, %v413
    %v429 = vadd.f32 %v398, %v414
    %v430 = vadd.f32 %v399, %v415
    %v431 = vadd.f32 %v400, %v416
    %v432 = vadd.f32 %v401, %v417
    %v433 = vadd.f32 %v402, %v418
    %v434 = vadd.f32 %v403, %v419
    %v435 = vperm.slane %v297, 2
    %v436 = vmul.f32 %v435, 0.0
    %v437 = vmul.f32 %v357, %v435
    %v438 = vmul.f32 %v358, %v435
    %v439 = vmul.f32 %v359, %v435
    %v440 = vmul.f32 %v360, %v435
    %v441 = vmul.f32 %v361, %v435
    %v442 = vmul.f32 %v362, %v435
    %v443 = vmul.f32 %v363, %v435
    %v444 = vmul.f32 %v365, %v435
    %v445 = vmul.f32 %v366, %v435
    %v446 = vmul.f32 %v367, %v435
    %v447 = vmul.f32 %v368, %v435
    %v448 = vmul.f32 %v369, %v435
    %v449 = vmul.f32 %v370, %v435
    %v450 = vmul.f32 %v371, %v435
    %v451 = vadd.f32 %v420, %v436
    %v452 = vadd.f32 %v421, %v437
    %v453 = vadd.f32 %v422, %v438
    %v454 = vadd.f32 %v423, %v439
    %v455 = vadd.f32 %v424, %v440
    %v456 = vadd.f32 %v425, %v441
    %v457 = vadd.f32 %v426, %v442
    %v458 = vadd.f32 %v427, %v443
    %v459 = vadd.f32 %v428, %v444
    %v460 = vadd.f32 %v429, %v445
    %v461 = vadd.f32 %v430, %v446
    %v462 = vadd.f32 %v431, %v447
    %v463 = vadd.f32 %v432, %v448
    %v464 = vadd.f32 %v433, %v449
    %v465 = vadd.f32 %v434, %v450
    %v466 = vperm.slane %v297, 3
    %v467 = vmul.f32 %v321, %v466
    %v468 = vmul.f32 %v322, %v466
    %v469 = vmul.f32 %v323, %v466
    %v470 = vmul.f32 %v324, %v466
    %v471 = vmul.f32 %v325, %v466
    %v472 = vmul.f32 %v326, %v466
    %v473 = vmul.f32 %v327, %v466
    %v474 = vmul.f32 %v328, %v466
    %v475 = vmul.f32 %v329, %v466
    %v476 = vmul.f32 %v330, %v466
    %v477 = vmul.f32 %v331, %v466
    %v478 = vmul.f32 %v332, %v466
    %v479 = vmul.f32 %v333, %v466
    %v480 = vmul.f32 %v334, %v466
    %v481 = vmul.f32 %v335, %v466
    %v482 = vmul.f32 %v336, %v466
    %v483 = vadd.f32 %v451, %v467
    %v484 = vadd.f32 %v452, %v468
    %v485 = vadd.f32 %v453, %v469
    %v486 = vadd.f32 %v454, %v470
    %v487 = vadd.f32 %v455, %v471
    %v488 = vadd.f32 %v456, %v472
    %v489 = vadd.f32 %v457, %v473
    %v490 = vadd.f32 %v458, %v474
    %v491 = vadd.f32 %v451, %v475
    %v492 = vadd.f32 %v459, %v476
    %v493 = vadd.f32 %v460, %v477
    %v494 = vadd.f32 %v461, %v478
    %v495 = vadd.f32 %v462, %v479
    %v496 = vadd.f32 %v463, %v480
    %v497 = vadd.f32 %v464, %v481
    %v498 = vadd.f32 %v465, %v482
    %v499 = vperm.slane %v297, 4
    %v500 = vmul.f32 %v279, %v499
    %v501 = vmul.f32 %v280, %v499
    %v502 = vmul.f32 %v281, %v499
    %v503 = vmul.f32 %v282, %v499
    %v504 = vmul.f32 %v283, %v499
    %v505 = vmul.f32 %v284, %v499
    %v506 = vmul.f32 %v285, %v499
    %v507 = vmul.f32 %v286, %v499
    %v508 = vmul.f32 %v287, %v499
    %v509 = vmul.f32 %v288, %v499
    %v510 = vmul.f32 %v289, %v499
    %v511 = vmul.f32 %v290, %v499
    %v512 = vmul.f32 %v291, %v499
    %v513 = vmul.f32 %v292, %v499
    %v514 = vmul.f32 %v293, %v499
    %v515 = vmul.f32 %v294, %v499
    %v516 = vadd.f32 %v483, %v500
    %v517 = vadd.f32 %v484, %v501
    %v518 = vadd.f32 %v485, %v502
    %v519 = vadd.f32 %v486, %v503
    %v520 = vadd.f32 %v487, %v504
    %v521 = vadd.f32 %v488, %v505
    %v522 = vadd.f32 %v489, %v506
    %v523 = vadd.f32 %v490, %v507
    %v524 = vadd.f32 %v491, %v508
    %v525 = vadd.f32 %v492, %v509
    %v526 = vadd.f32 %v493, %v510
    %v527 = vadd.f32 %v494, %v511
    %v528 = vadd.f32 %v495, %v512
    %v529 = vadd.f32 %v496, %v513
    %v530 = vadd.f32 %v497, %v514
    %v531 = vadd.f32 %v498, %v515
    %v532 = vperm.slane %v297, 5
    %v533 = vmul.f32 %v357, %v532
    %v534 = vmul.f32 %v358, %v532
    %v535 = vmul.f32 %v359, %v532
    %v536 = vmul.f32 %v360, %v532
    %v537 = vmul.f32 %v361, %v532
    %v538 = vmul.f32 %v362, %v532
    %v539 = vmul.f32 %v363, %v532
    %v540 = vmul.f32 %v364, %v532
    %v541 = vmul.f32 %v365, %v532
    %v542 = vmul.f32 %v366, %v532
    %v543 = vmul.f32 %v367, %v532
    %v544 = vmul.f32 %v368, %v532
    %v545 = vmul.f32 %v369, %v532
    %v546 = vmul.f32 %v370, %v532
    %v547 = vmul.f32 %v371, %v532
    %v548 = vmul.f32 %v372, %v532
    %v549 = vadd.f32 %v516, %v533
    %v550 = vadd.f32 %v517, %v534
    %v551 = vadd.f32 %v518, %v535
    %v552 = vadd.f32 %v519, %v536
    %v553 = vadd.f32 %v520, %v537
    %v554 = vadd.f32 %v521, %v538
    %v555 = vadd.f32 %v522, %v539
    %v556 = vadd.f32 %v523, %v540
    %v557 = vadd.f32 %v524, %v541
    %v558 = vadd.f32 %v525, %v542
    %v559 = vadd.f32 %v526, %v543
    %v560 = vadd.f32 %v527, %v544
    %v561 = vadd.f32 %v528, %v545
    %v562 = vadd.f32 %v529, %v546
    %v563 = vadd.f32 %v530, %v547
    %v564 = vadd.f32 %v531, %v548
    %v565 = vperm.slane %v297, 6
    %v566 = vmul.f32 %v322, %v565
    %v567 = vmul.f32 %v323, %v565
    %v568 = vmul.f32 %v324, %v565
    %v569 = vmul.f32 %v325, %v565
    %v570 = vmul.f32 %v326, %v565
    %v571 = vmul.f32 %v327, %v565
    %v572 = vmul.f32 %v328, %v565
    %v573 = vmul.f32 %v565, 0.0
    %v574 = vmul.f32 %v330, %v565
    %v575 = vmul.f32 %v331, %v565
    %v576 = vmul.f32 %v332, %v565
    %v577 = vmul.f32 %v333, %v565
    %v578 = vmul.f32 %v334, %v565
    %v579 = vmul.f32 %v335, %v565
    %v580 = vmul.f32 %v336, %v565
    %v581 = vadd.f32 %v549, %v566
    %v582 = vadd.f32 %v550, %v567
    %v583 = vadd.f32 %v551, %v568
    %v584 = vadd.f32 %v552, %v569
    %v585 = vadd.f32 %v553, %v570
    %v586 = vadd.f32 %v554, %v571
    %v587 = vadd.f32 %v555, %v572
    %v588 = vadd.f32 %v556, %v573
    %v589 = vadd.f32 %v557, %v574
    %v590 = vadd.f32 %v558, %v575
    %v591 = vadd.f32 %v559, %v576
    %v592 = vadd.f32 %v560, %v577
    %v593 = vadd.f32 %v561, %v578
    %v594 = vadd.f32 %v562, %v579
    %v595 = vadd.f32 %v563, %v580
    %v596 = vadd.f32 %v564, %v573
    %v597 = vperm.slane %v297, 7
    %v598 = vmul.f32 %v280, %v597
    %v599 = vmul.f32 %v281, %v597
    %v600 = vmul.f32 %v282, %v597
    %v601 = vmul.f32 %v283, %v597
    %v602 = vmul.f32 %v284, %v597
    %v603 = vmul.f32 %v285, %v597
    %v604 = vmul.f32 %v286, %v597
    %v605 = vmul.f32 %v597, 0.0
    %v606 = vmul.f32 %v288, %v597
    %v607 = vmul.f32 %v289, %v597
    %v608 = vmul.f32 %v290, %v597
    %v609 = vmul.f32 %v291, %v597
    %v610 = vmul.f32 %v292, %v597
    %v611 = vmul.f32 %v293, %v597
    %v612 = vmul.f32 %v294, %v597
    %v613 = vadd.f32 %v581, %v598
    %v614 = vadd.f32 %v582, %v599
    %v615 = vadd.f32 %v583, %v600
    %v616 = vadd.f32 %v584, %v601
    %v617 = vadd.f32 %v585, %v602
    %v618 = vadd.f32 %v586, %v603
    %v619 = vadd.f32 %v587, %v604
    %v620 = vadd.f32 %v588, %v605
    %v621 = vadd.f32 %v589, %v606
    %v622 = vadd.f32 %v590, %v607
    %v623 = vadd.f32 %v591, %v608
    %v624 = vadd.f32 %v592, %v609
    %v625 = vadd.f32 %v593, %v610
    %v626 = vadd.f32 %v594, %v611
    %v627 = vadd.f32 %v595, %v612
    %v628 = vadd.f32 %v596, %v605
    %v629 = vperm.slane %v298, 0
    %v630 = vmul.f32 %v358, %v629
    %v631 = vmul.f32 %v359, %v629
    %v632 = vmul.f32 %v360, %v629
    %v633 = vmul.f32 %v361, %v629
    %v634 = vmul.f32 %v362, %v629
    %v635 = vmul.f32 %v363, %v629
    %v636 = vmul.f32 %v364, %v629
    %v637 = vmul.f32 %v629, 0.0
    %v638 = vmul.f32 %v366, %v629
    %v639 = vmul.f32 %v367, %v629
    %v640 = vmul.f32 %v368, %v629
    %v641 = vmul.f32 %v369, %v629
    %v642 = vmul.f32 %v370, %v629
    %v643 = vmul.f32 %v371, %v629
    %v644 = vmul.f32 %v372, %v629
    %v645 = vadd.f32 %v613, %v630
    %v646 = vadd.f32 %v614, %v631
    %v647 = vadd.f32 %v615, %v632
    %v648 = vadd.f32 %v616, %v633
    %v649 = vadd.f32 %v617, %v634
    %v650 = vadd.f32 %v618, %v635
    %v651 = vadd.f32 %v619, %v636
    %v652 = vadd.f32 %v620, %v637
    %v653 = vadd.f32 %v621, %v638
    %v654 = vadd.f32 %v622, %v639
    %v655 = vadd.f32 %v623, %v640
    %v656 = vadd.f32 %v624, %v641
    %v657 = vadd.f32 %v625, %v642
    %v658 = vadd.f32 %v626, %v643
    %v659 = vadd.f32 %v627, %v644
    %v660 = vadd.f32 %v628, %v637
    %v661 = vld [vmem:[#allocation5] sm:$0x1]
    %v663 = vperm.slane %v661, 0
    %v665 = vadd.f32 %v645, %v663
    %v666 = vadd.f32 %v646, %v663
    %v667 = vadd.f32 %v647, %v663
    %v668 = vadd.f32 %v648, %v663
    %v669 = vadd.f32 %v649, %v663
    %v670 = vadd.f32 %v650, %v663
    %v671 = vadd.f32 %v651, %v663
    %v672 = vadd.f32 %v652, %v663
    %v673 = vadd.f32 %v653, %v663
    %v674 = vadd.f32 %v654, %v663
    %v675 = vadd.f32 %v655, %v663
    %v676 = vadd.f32 %v656, %v663
    %v677 = vadd.f32 %v657, %v663
    %v678 = vadd.f32 %v658, %v663
    %v679 = vadd.f32 %v659, %v663
    %v680 = vadd.f32 %v660, %v663
    %v681 = vadd.f32 %v665, 3.0
    %v682 = vadd.f32 %v666, 3.0
    %v683 = vadd.f32 %v667, 3.0
    %v684 = vadd.f32 %v668, 3.0
    %v685 = vadd.f32 %v669, 3.0
    %v686 = vadd.f32 %v670, 3.0
    %v687 = vadd.f32 %v671, 3.0
    %v688 = vadd.f32 %v672, 3.0
    %v689 = vadd.f32 %v673, 3.0
    %v690 = vadd.f32 %v674, 3.0
    %v691 = vadd.f32 %v675, 3.0
    %v692 = vadd.f32 %v676, 3.0
    %v693 = vadd.f32 %v677, 3.0
    %v694 = vadd.f32 %v678, 3.0
    %v695 = vadd.f32 %v679, 3.0
    %v696 = vadd.f32 %v680, 3.0
    %v697 = vmax.f32 %v681, 0.0
    %v698 = vmax.f32 %v682, 0.0
    %v699 = vmax.f32 %v683, 0.0
    %v700 = vmax.f32 %v684, 0.0
    %v701 = vmax.f32 %v685, 0.0
    %v702 = vmax.f32 %v686, 0.0
    %v703 = vmax.f32 %v687, 0.0
    %v704 = vmax.f32 %v688, 0.0
    %v705 = vmax.f32 %v689, 0.0
    %v706 = vmax.f32 %v690, 0.0
    %v707 = vmax.f32 %v691, 0.0
    %v708 = vmax.f32 %v692, 0.0
    %v709 = vmax.f32 %v693, 0.0
    %v710 = vmax.f32 %v694, 0.0
    %v711 = vmax.f32 %v695, 0.0
    %v712 = vmax.f32 %v696, 0.0
    %v713 = vmin.f32 %v697, 6.0
    %v714 = vmin.f32 %v698, 6.0
    %v715 = vmin.f32 %v699, 6.0
    %v716 = vmin.f32 %v700, 6.0
    %v717 = vmin.f32 %v701, 6.0
    %v718 = vmin.f32 %v702, 6.0
    %v719 = vmin.f32 %v703, 6.0
    %v720 = vmin.f32 %v704, 6.0
    %v721 = vmin.f32 %v705, 6.0
    %v722 = vmin.f32 %v706, 6.0
    %v723 = vmin.f32 %v707, 6.0
    %v724 = vmin.f32 %v708, 6.0
    %v725 = vmin.f32 %v709, 6.0
    %v726 = vmin.f32 %v710, 6.0
    %v727 = vmin.f32 %v711, 6.0
    %v728 = vmin.f32 %v712, 6.0
    %v729 = vmul.f32 %v665, %v713
    %v730 = vmul.f32 %v666, %v714
    %v731 = vmul.f32 %v667, %v715
    %v732 = vmul.f32 %v668, %v716
    %v733 = vmul.f32 %v669, %v717
    %v734 = vmul.f32 %v670, %v718
    %v735 = vmul.f32 %v671, %v719
    %v736 = vmul.f32 %v672, %v720
    %v737 = vmul.f32 %v673, %v721
    %v738 = vmul.f32 %v674, %v722
    %v739 = vmul.f32 %v675, %v723
    %v740 = vmul.f32 %v676, %v724
    %v741 = vmul.f32 %v677, %v725
    %v742 = vmul.f32 %v678, %v726
    %v743 = vmul.f32 %v679, %v727
    %v744 = vmul.f32 %v680, %v728
    %v745 = vmul.f32 %v729, 0.16666667
    %v746 = vmul.f32 %v730, 0.16666667
    %v747 = vmul.f32 %v731, 0.16666667
    %v748 = vmul.f32 %v732, 0.16666667
    %v749 = vmul.f32 %v733, 0.16666667
    %v750 = vmul.f32 %v734, 0.16666667
    %v751 = vmul.f32 %v735, 0.16666667
    %v752 = vmul.f32 %v736, 0.16666667
    %v753 = vmul.f32 %v737, 0.16666667
    %v754 = vmul.f32 %v738, 0.16666667
    %v755 = vmul.f32 %v739, 0.16666667
    %v756 = vmul.f32 %v740, 0.16666667
    %v757 = vmul.f32 %v741, 0.16666667
    %v758 = vmul.f32 %v742, 0.16666667
    %v759 = vmul.f32 %v743, 0.16666667
    %v760 = vmul.f32 %v744, 0.16666667
    %vm761 = vcmask 130048
    %v762 = vsel %vm761, %v745, 0.0
    %v763 = vsel %vm761, %v746, 0.0
    %v764 = vadd.f32 %v762, %v763
    %v765 = vsel %vm761, %v747, 0.0
    %v766 = vadd.f32 %v764, %v765
    %v767 = vsel %vm761, %v748, 0.0
    %v768 = vadd.f32 %v766, %v767
    %v769 = vsel %vm761, %v749, 0.0
    %v770 = vadd.f32 %v768, %v769
    %v771 = vsel %vm761, %v750, 0.0
    %v772 = vadd.f32 %v770, %v771
    %v773 = vsel %vm761, %v751, 0.0
    %v774 = vadd.f32 %v772, %v773
    %v775 = vsel %vm761, %v752, 0.0
    %v776 = vadd.f32 %v774, %v775
    %v777 = vsel %vm761, %v753, 0.0
    %v778 = vsel %vm761, %v754, 0.0
    %v779 = vadd.f32 %v777, %v778
    %v780 = vsel %vm761, %v755, 0.0
    %v781 = vadd.f32 %v779, %v780
    %v782 = vsel %vm761, %v756, 0.0
    %v783 = vadd.f32 %v781, %v782
    %v784 = vsel %vm761, %v757, 0.0
    %v785 = vadd.f32 %v783, %v784
    %v786 = vsel %vm761, %v758, 0.0
    %v787 = vadd.f32 %v785, %v786
    %v788 = vsel %vm761, %v759, 0.0
    %v789 = vadd.f32 %v787, %v788
    %v790 = vsel %vm761, %v760, 0.0
    %v791 = vadd.f32 %v789, %v790
    %v792 = vsel %vm761, %v776, 0.0
    %v793 = vrot.slane %v792, 4
    %v794 = vadd.f32 %v792, %v793
    %v795 = vrot.slane %v794, 2
    %v796 = vadd.f32 %v794, %v795
    %v797 = vrot.slane %v796, 1
    %v798 = vadd.f32 %v796, %v797
    %v799 = vsel %vm761, %v791, 0.0
    %v800 = vrot.slane %v799, 4
    %v801 = vadd.f32 %v799, %v800
    %v802 = vrot.slane %v801, 2
    %v803 = vadd.f32 %v801, %v802
    %v804 = vrot.slane %v803, 1
    %v805 = vadd.f32 %v803, %v804
    %v806 = vmul.f32 %v798, 0.015625
    %v807 = vmul.f32 %v805, 0.015625
    %v808 = vpack.c.bf16 %v806, %v806
    %v809 = vpack.c.bf16 %v807, %v807
    %v810 = vld [vmem:[%s5] sm:$0xf]
    %v811 = vld [vmem:[%s5 + $0x4] sm:$0xf]
    %v812 = vld [vmem:[%s6] sm:$0x1]
    %v814 = vperm.slane %v812, 0
    %v818 = vunpack.c.l.b16 %v808
    %v819 = vunpack.c.l.b16 %v809
    %vm820 = vcmask 1041409
    %v821 = vsel %vm820, %v819, %v818
    %v822 = vpack.c.b16 %v821, %v821
    %v825 = vunpack.c.l.b16 %v810
    %v826 = vunpack.c.l.b16 %v811
    %v827 = vpack.c.b16 %v826, %v825
    %v830 = vsel %vm761, %v822, 0
    %832 = vmatpush.bf16.msra.mxu0 0
    %833 = vmatpush.bf16.msra.mxu0 0
    %834 = vmatpush.bf16.msra.mxu0 0
    %835 = vmatpush.bf16.msra.mxu0 0
    %836 = vmatpush.bf16.msra.mxu0 0
    %837 = vmatpush.bf16.msra.mxu0 0
    %838 = vmatpush.bf16.msra.mxu0 0
    %839 = vmatpush.bf16.msra.mxu0 %v827
    %840 = vmatmul.bf16.gmra.mxu0 %v830
    %v841 = vpop.f32.mrf.mxu0
    %v842 = vadd.f32 %v814, %v841
    %v843 = vpop.f32.mrf.mxu0
    %844 = vdwg.mxu0
    %v845 = vmax.f32 %v842, 0.0
    %v846 = vmin.f32 %v845, 6.0
    %v847 = vpack.c.bf16 %v846, %v846
    %v848 = vld [vmem:[%s7] sm:$0x3]
    %v849 = vld [vmem:[%s8] sm:$0x1]
    %v851 = vperm.slane %v849, 0
    %vm853 = vcmask 31744
    %v855 = vsel %vm853, %v847, 0
    %vm857 = vcmask 1041408
    %v859 = vsel %vm857, %v848, 0
    %861 = vmatpush.bf16.msra.mxu0 0
    %862 = vmatpush.bf16.msra.mxu0 0
    %863 = vmatpush.bf16.msra.mxu0 0
    %864 = vmatpush.bf16.msra.mxu0 0
    %865 = vmatpush.bf16.msra.mxu0 0
    %866 = vmatpush.bf16.msra.mxu0 0
    %867 = vmatpush.bf16.msra.mxu0 0
    %868 = vmatpush.bf16.msra.mxu0 %v859
    %869 = vmatmul.bf16.gmra.mxu0 %v855
    %v870 = vpop.f32.mrf.mxu0
    %v871 = vadd.f32 %v851, %v870
    %v872 = vpop.f32.mrf.mxu0
    %873 = vdwg.mxu0
    %v874 = vadd.f32 %v871, 3.0
    %v875 = vmax.f32 %v874, 0.0
    %v876 = vmin.f32 %v875, 6.0
    %v877 = vmul.f32 %v871, %v876
    %v878 = vmul.f32 %v877, 0.16666667
    %v880 = vrot.slane %v878, 1
    %v881 = vperm.slane %v878, 0
    %v882 = vperm.slane %v880, 0
    %v885 = vmul.f32 %v745, %v881
    %v886 = vmul.f32 %v746, %v881
    %v887 = vmul.f32 %v747, %v881
    %v888 = vmul.f32 %v748, %v881
    %v889 = vmul.f32 %v749, %v881
    %v890 = vmul.f32 %v750, %v881
    %v891 = vmul.f32 %v751, %v881
    %v892 = vmul.f32 %v752, %v881
    %v893 = vmul.f32 %v753, %v882
    %v894 = vmul.f32 %v754, %v882
    %v895 = vmul.f32 %v755, %v882
    %v896 = vmul.f32 %v756, %v882
    %v897 = vmul.f32 %v757, %v882
    %v898 = vmul.f32 %v758, %v882
    %v899 = vmul.f32 %v759, %v882
    %v900 = vmul.f32 %v760, %v882
    %v901 = vpack.c.bf16 %v886, %v885
    %v902 = vpack.c.bf16 %v888, %v887
    %v903 = vpack.c.bf16 %v890, %v889
    %v904 = vpack.c.bf16 %v892, %v891
    %v905 = vpack.c.bf16 %v894, %v893
    %v906 = vpack.c.bf16 %v896, %v895
    %v907 = vpack.c.bf16 %v898, %v897
    %v908 = vpack.c.bf16 %v900, %v899
    %v909 = vld [vmem:[%s9] sm:$0xf]
    %v910 = vld [vmem:[%s9 + $0x4] sm:$0xf]
    %v911 = vld [vmem:[%s10] sm:$0x1]
    %v913 = vperm.slane %v911, 0
    %v917 = vunpack.c.l.b16 %v909
    %v918 = vunpack.c.l.b16 %v910
    %v919 = vpack.c.b16 %v918, %v917
    %v922 = vsel %vm761, %v901, 0
    %v925 = vsel %vm761, %v902, 0
    %v928 = vsel %vm761, %v903, 0
    %v931 = vsel %vm761, %v904, 0
    %v934 = vsel %vm761, %v905, 0
    %v937 = vsel %vm761, %v906, 0
    %v940 = vsel %vm761, %v907, 0
    %v943 = vsel %vm761, %v908, 0
    %945 = vmatpush.bf16.msra.mxu0 0
    %946 = vmatpush.bf16.msra.mxu0 0
    %947 = vmatpush.bf16.msra.mxu0 0
    %948 = vmatpush.bf16.msra.mxu0 0
    %949 = vmatpush.bf16.msra.mxu0 0
    %950 = vmatpush.bf16.msra.mxu0 0
    %951 = vmatpush.bf16.msra.mxu0 0
    %952 = vmatpush.bf16.msra.mxu0 %v919
    %953 = vmatmul.bf16.gmra.mxu0 %v922
    %v954 = vpop.f32.mrf.mxu0
    %v955 = vadd.f32 %v913, %v954
    %v956 = vpop.f32.mrf.mxu0
    %v957 = vadd.f32 %v913, %v956
    %958 = vmatmul.bf16.gmra.mxu0 %v925
    %v959 = vpop.f32.mrf.mxu0
    %v960 = vadd.f32 %v913, %v959
    %v961 = vpop.f32.mrf.mxu0
    %v962 = vadd.f32 %v913, %v961
    %963 = vmatmul.bf16.gmra.mxu0 %v928
    %v964 = vpop.f32.mrf.mxu0
    %v965 = vadd.f32 %v913, %v964
    %v966 = vpop.f32.mrf.mxu0
    %v967 = vadd.f32 %v913, %v966
    %968 = vmatmul.bf16.gmra.mxu0 %v931
    %v969 = vpop.f32.mrf.mxu0
    %v970 = vadd.f32 %v913, %v969
    %v971 = vpop.f32.mrf.mxu0
    %v972 = vadd.f32 %v913, %v971
    %973 = vmatmul.bf16.gmra.mxu0 %v934
    %v974 = vpop.f32.mrf.mxu0
    %v975 = vadd.f32 %v913, %v974
    %v976 = vpop.f32.mrf.mxu0
    %v977 = vadd.f32 %v913, %v976
    %978 = vmatmul.bf16.gmra.mxu0 %v937
    %v979 = vpop.f32.mrf.mxu0
    %v980 = vadd.f32 %v913, %v979
    %v981 = vpop.f32.mrf.mxu0
    %v982 = vadd.f32 %v913, %v981
    %983 = vmatmul.bf16.gmra.mxu0 %v940
    %v984 = vpop.f32.mrf.mxu0
    %v985 = vadd.f32 %v913, %v984
    %v986 = vpop.f32.mrf.mxu0
    %v987 = vadd.f32 %v913, %v986
    %988 = vmatmul.bf16.gmra.mxu0 %v943
    %v989 = vpop.f32.mrf.mxu0
    %v990 = vadd.f32 %v913, %v989
    %v991 = vpop.f32.mrf.mxu0
    %v992 = vadd.f32 %v913, %v991
    %993 = vdwg.mxu0
    %v994 = vadd.f32 %v955, 3.0
    %v995 = vadd.f32 %v957, 3.0
    %v996 = vadd.f32 %v960, 3.0
    %v997 = vadd.f32 %v962, 3.0
    %v998 = vadd.f32 %v965, 3.0
    %v999 = vadd.f32 %v967, 3.0
    %v1000 = vadd.f32 %v970, 3.0
    %v1001 = vadd.f32 %v972, 3.0
    %v1002 = vadd.f32 %v975, 3.0
    %v1003 = vadd.f32 %v977, 3.0
    %v1004 = vadd.f32 %v980, 3.0
    %v1005 = vadd.f32 %v982, 3.0
    %v1006 = vadd.f32 %v985, 3.0
    %v1007 = vadd.f32 %v987, 3.0
    %v1008 = vadd.f32 %v990, 3.0
    %v1009 = vadd.f32 %v992, 3.0
    %v1010 = vmax.f32 %v994, 0.0
    %v1011 = vmax.f32 %v995, 0.0
    %v1012 = vmax.f32 %v996, 0.0
    %v1013 = vmax.f32 %v997, 0.0
    %v1014 = vmax.f32 %v998, 0.0
    %v1015 = vmax.f32 %v999, 0.0
    %v1016 = vmax.f32 %v1000, 0.0
    %v1017 = vmax.f32 %v1001, 0.0
    %v1018 = vmax.f32 %v1002, 0.0
    %v1019 = vmax.f32 %v1003, 0.0
    %v1020 = vmax.f32 %v1004, 0.0
    %v1021 = vmax.f32 %v1005, 0.0
    %v1022 = vmax.f32 %v1006, 0.0
    %v1023 = vmax.f32 %v1007, 0.0
    %v1024 = vmax.f32 %v1008, 0.0
    %v1025 = vmax.f32 %v1009, 0.0
    %v1026 = vmin.f32 %v1010, 6.0
    %v1027 = vmin.f32 %v1011, 6.0
    %v1028 = vmin.f32 %v1012, 6.0
    %v1029 = vmin.f32 %v1013, 6.0
    %v1030 = vmin.f32 %v1014, 6.0
    %v1031 = vmin.f32 %v1015, 6.0
    %v1032 = vmin.f32 %v1016, 6.0
    %v1033 = vmin.f32 %v1017, 6.0
    %v1034 = vmin.f32 %v1018, 6.0
    %v1035 = vmin.f32 %v1019, 6.0
    %v1036 = vmin.f32 %v1020, 6.0
    %v1037 = vmin.f32 %v1021, 6.0
    %v1038 = vmin.f32 %v1022, 6.0
    %v1039 = vmin.f32 %v1023, 6.0
    %v1040 = vmin.f32 %v1024, 6.0
    %v1041 = vmin.f32 %v1025, 6.0
    %v1042 = vmul.f32 %v955, %v1026
    %v1043 = vmul.f32 %v957, %v1027
    %v1044 = vmul.f32 %v960, %v1028
    %v1045 = vmul.f32 %v962, %v1029
    %v1046 = vmul.f32 %v965, %v1030
    %v1047 = vmul.f32 %v967, %v1031
    %v1048 = vmul.f32 %v970, %v1032
    %v1049 = vmul.f32 %v972, %v1033
    %v1050 = vmul.f32 %v975, %v1034
    %v1051 = vmul.f32 %v977, %v1035
    %v1052 = vmul.f32 %v980, %v1036
    %v1053 = vmul.f32 %v982, %v1037
    %v1054 = vmul.f32 %v985, %v1038
    %v1055 = vmul.f32 %v987, %v1039
    %v1056 = vmul.f32 %v990, %v1040
    %v1057 = vmul.f32 %v992, %v1041
    %v1058 = vmul.f32 %v1042, 0.16666667
    %v1059 = vmul.f32 %v1043, 0.16666667
    %v1060 = vmul.f32 %v1044, 0.16666667
    %v1061 = vmul.f32 %v1045, 0.16666667
    %v1062 = vmul.f32 %v1046, 0.16666667
    %v1063 = vmul.f32 %v1047, 0.16666667
    %v1064 = vmul.f32 %v1048, 0.16666667
    %v1065 = vmul.f32 %v1049, 0.16666667
    %v1066 = vmul.f32 %v1050, 0.16666667
    %v1067 = vmul.f32 %v1051, 0.16666667
    %v1068 = vmul.f32 %v1052, 0.16666667
    %v1069 = vmul.f32 %v1053, 0.16666667
    %v1070 = vmul.f32 %v1054, 0.16666667
    %v1071 = vmul.f32 %v1055, 0.16666667
    %v1072 = vmul.f32 %v1056, 0.16666667
    %v1073 = vmul.f32 %v1057, 0.16666667
    %v1074 = vld [vmem:[%s11] sm:$0xf]
    %v1076 = vsel %vm162, %v1074, 0
    %1078 = vmatpush.bf16.msra.mxu0 0
    %1079 = vmatpush.bf16.msra.mxu0 0
    %1080 = vmatpush.bf16.msra.mxu0 0
    %1081 = vmatpush.bf16.msra.mxu0 0
    %1082 = vmatpush.bf16.msra.mxu0 0
    %1083 = vmatpush.bf16.msra.mxu0 0
    %1084 = vmatpush.bf16.msra.mxu0 0
    %1085 = vmatpush.bf16.msra.mxu0 %v1076
    %1086 = vmatmul.bf16.gmra.mxu0 %v139
    %v1087 = vpop.f32.mrf.mxu0
    %v1088 = vadd.f32 0.0, %v1087
    %v1089 = vpop.f32.mrf.mxu0
    %v1090 = vadd.f32 0.0, %v1089
    %1091 = vmatmul.bf16.gmra.mxu0 %v142
    %v1092 = vpop.f32.mrf.mxu0
    %v1093 = vadd.f32 0.0, %v1092
    %v1094 = vpop.f32.mrf.mxu0
    %v1095 = vadd.f32 0.0, %v1094
    %1096 = vmatmul.bf16.gmra.mxu0 %v145
    %v1097 = vpop.f32.mrf.mxu0
    %v1098 = vadd.f32 0.0, %v1097
    %v1099 = vpop.f32.mrf.mxu0
    %v1100 = vadd.f32 0.0, %v1099
    %1101 = vmatmul.bf16.gmra.mxu0 %v148
    %v1102 = vpop.f32.mrf.mxu0
    %v1103 = vadd.f32 0.0, %v1102
    %v1104 = vpop.f32.mrf.mxu0
    %v1105 = vadd.f32 0.0, %v1104
    %1106 = vmatmul.bf16.gmra.mxu0 %v151
    %v1107 = vpop.f32.mrf.mxu0
    %v1108 = vadd.f32 0.0, %v1107
    %v1109 = vpop.f32.mrf.mxu0
    %v1110 = vadd.f32 0.0, %v1109
    %1111 = vmatmul.bf16.gmra.mxu0 %v154
    %v1112 = vpop.f32.mrf.mxu0
    %v1113 = vadd.f32 0.0, %v1112
    %v1114 = vpop.f32.mrf.mxu0
    %v1115 = vadd.f32 0.0, %v1114
    %1116 = vmatmul.bf16.gmra.mxu0 %v157
    %v1117 = vpop.f32.mrf.mxu0
    %v1118 = vadd.f32 0.0, %v1117
    %v1119 = vpop.f32.mrf.mxu0
    %v1120 = vadd.f32 0.0, %v1119
    %1121 = vmatmul.bf16.gmra.mxu0 %v160
    %v1122 = vpop.f32.mrf.mxu0
    %v1123 = vadd.f32 0.0, %v1122
    %v1124 = vpop.f32.mrf.mxu0
    %v1125 = vadd.f32 0.0, %v1124
    %1126 = vdwg.mxu0
    %v1127 = vadd.f32 %v1058, %v1088
    %v1128 = vadd.f32 %v1059, %v1090
    %v1129 = vadd.f32 %v1060, %v1093
    %v1130 = vadd.f32 %v1061, %v1095
    %v1131 = vadd.f32 %v1062, %v1098
    %v1132 = vadd.f32 %v1063, %v1100
    %v1133 = vadd.f32 %v1064, %v1103
    %v1134 = vadd.f32 %v1065, %v1105
    %v1135 = vadd.f32 %v1066, %v1108
    %v1136 = vadd.f32 %v1067, %v1110
    %v1137 = vadd.f32 %v1068, %v1113
    %v1138 = vadd.f32 %v1069, %v1115
    %v1139 = vadd.f32 %v1070, %v1118
    %v1140 = vadd.f32 %v1071, %v1120
    %v1141 = vadd.f32 %v1072, %v1123
    %v1142 = vadd.f32 %v1073, %v1125
    %v1143 = vld [vmem:[%s12] sm:$0x1]
    %v1145 = vperm.slane %v1143, 0
    %v1147 = vadd.f32 %v1127, %v1145
    %v1148 = vadd.f32 %v1128, %v1145
    %v1149 = vadd.f32 %v1129, %v1145
    %v1150 = vadd.f32 %v1130, %v1145
    %v1151 = vadd.f32 %v1131, %v1145
    %v1152 = vadd.f32 %v1132, %v1145
    %v1153 = vadd.f32 %v1133, %v1145
    %v1154 = vadd.f32 %v1134, %v1145
    %v1155 = vadd.f32 %v1135, %v1145
    %v1156 = vadd.f32 %v1136, %v1145
    %v1157 = vadd.f32 %v1137, %v1145
    %v1158 = vadd.f32 %v1138, %v1145
    %v1159 = vadd.f32 %v1139, %v1145
    %v1160 = vadd.f32 %v1140, %v1145
    %v1161 = vadd.f32 %v1141, %v1145
    %v1162 = vadd.f32 %v1142, %v1145
    %1163 = vst.msk [vmem:[#allocation7] sm:$0xff] %vm137, %v1147
    %1164 = vst.msk [vmem:[#allocation7 + $0x8] sm:$0xff] %vm137, %v1148
    %1165 = vst.msk [vmem:[#allocation7 + $0x10] sm:$0xff] %vm137, %v1149
    %1166 = vst.msk [vmem:[#allocation7 + $0x18] sm:$0xff] %vm137, %v1150
    %1167 = vst.msk [vmem:[#allocation7 + $0x20] sm:$0xff] %vm137, %v1151
    %1168 = vst.msk [vmem:[#allocation7 + $0x28] sm:$0xff] %vm137, %v1152
    %1169 = vst.msk [vmem:[#allocation7 + $0x30] sm:$0xff] %vm137, %v1153
    %1170 = vst.msk [vmem:[#allocation7 + $0x38] sm:$0xff] %vm137, %v1154
    %1171 = vst.msk [vmem:[#allocation7 + $0x40] sm:$0xff] %vm137, %v1155
    %1172 = vst.msk [vmem:[#allocation7 + $0x48] sm:$0xff] %vm137, %v1156
    %1173 = vst.msk [vmem:[#allocation7 + $0x50] sm:$0xff] %vm137, %v1157
    %1174 = vst.msk [vmem:[#allocation7 + $0x58] sm:$0xff] %vm137, %v1158
    %1175 = vst.msk [vmem:[#allocation7 + $0x60] sm:$0xff] %vm137, %v1159
    %1176 = vst.msk [vmem:[#allocation7 + $0x68] sm:$0xff] %vm137, %v1160
    %1177 = vst.msk [vmem:[#allocation7 + $0x70] sm:$0xff] %vm137, %v1161
    %1178 = vst.msk [vmem:[#allocation7 + $0x78] sm:$0xff] %vm137, %v1162
    // Predicated region
    $region62: #{tpu_custom_call.1} parent=1 // pred_check
      _
    $region63: #{tpu_custom_call.1} parent=1 // pred_check_branch
      %1180 = sbr.rel (0) target = $region65
    $region64: #{tpu_custom_call.1} parent=1 // pred_region
      %1182 = vsyncadd [#allocation4], 0
      %s1183 = sshll.u32 [#allocation7], 4
      %s1184 = int_to_ptr.vmem [resolvable:$true] %s1183
      %s1185 = sshll.u32 %s13, 4
      %s1186 = int_to_ptr.hbm [resolvable:$true] %s1185
      %1191 = dma.vmem_to_hbm [thread:$0]  %s1184, 2048, %s1186, [#allocation4], 128, 128, 8
    $region65: #{tpu_custom_call.1} parent=1 // pred_fallthru
      _
    // Predicated region
    $region66: #{tpu_custom_call.1} parent=1 // pred_check
      _
    $region67: #{tpu_custom_call.1} parent=1 // pred_check_branch
      %1193 = sbr.rel (0) target = $region69
    $region68: #{tpu_custom_call.1} parent=1 // pred_region
      %1195 = dma.done [#allocation4], 2048
    $region69: #{tpu_custom_call.1} parent=1 // pred_fallthru
      _
    %1196 = vsyncpa [#allocation3], 1
    %1197 = vsyncpa [#allocation6], 1
    %1198 = vsyncpa [#allocation4], 1

</llo_original>
